<compile_context>
chip_gen: v7x
topology: tpu7x:2x2x1
jax: 0.10.0
libtpu: 0.0.40
codegen_flags: <defaults>
</compile_context>

<pallas_src>
import jax
import jax.numpy as jnp
import numpy as np
from jax import lax
from jax.experimental import pallas as pl
from jax.experimental.pallas import tpu as pltpu


# ----------------------------- Pallas kernels ------------------------------ #

def _conv_relu_pool_kernel(p_ref, w_ref, b_ref, o_ref):
    """5x5 valid conv (one K=25*Cin matmul per pool offset) + bias + ReLU + 2x2 maxpool.

    p_ref : (1, 4, K, HWp)  transposed im2col patches, one slot per 2x2
                            pooling-window offset (dh, dw).
    w_ref : (Cout, K)       transposed conv weight.
    b_ref : (Cout, 1)       conv bias.
    o_ref : (1, Cout, HWp)  pooled output, channel-major (lane dim = HWp).
    """
    wt = w_ref[...]
    # Static unroll over the 4 pooling-window offsets; running elementwise max.
    acc = jnp.dot(wt, p_ref[0, 0], preferred_element_type=jnp.float32)
    for i in range(1, 4):
        acc = jnp.maximum(
            acc, jnp.dot(wt, p_ref[0, i], preferred_element_type=jnp.float32))
    # Bias is constant across the 4 pool offsets and ReLU is monotone, so
    # max -> +bias -> ReLU  ==  maxpool(ReLU(conv + bias)).
    o_ref[0] = jnp.maximum(acc + b_ref[...], 0.0).astype(o_ref.dtype)


def _mlp_kernel(x_ref, w1_ref, b1_ref, w2_ref, b2_ref, w3_ref, b3_ref, o_ref):
    """fc1+ReLU -> fc2+ReLU -> fc3, fused into one kernel (no HBM round trips)."""
    h = jnp.dot(x_ref[...], w1_ref[...], preferred_element_type=jnp.float32)
    h = jnp.maximum(h + b1_ref[...], 0.0)
    h = jnp.dot(h, w2_ref[...], preferred_element_type=jnp.float32)
    h = jnp.maximum(h + b2_ref[...], 0.0)
    y = jnp.dot(h, w3_ref[...], preferred_element_type=jnp.float32) + b3_ref[...]
    o_ref[...] = y.astype(o_ref.dtype)


# ------------------------------- wrappers ---------------------------------- #

def conv5x5_relu_pool(x_nchw, w_oihw, b):
    """Valid 5x5 conv (stride 1) + bias + ReLU + 2x2/2 maxpool.  NCHW in/out."""
    N, Cin, H, W = x_nchw.shape
    Cout, _, KH, KW = w_oihw.shape
    Ho, Wo = H - KH + 1, W - KW + 1
    Hp, Wp = Ho // 2, Wo // 2
    HWp = Hp * Wp
    K = KH * KW * Cin

    # ---- glue (fused by XLA under jit): transposed im2col, grouped by the
    # four 2x2 pooling-window offsets ----
    x_nhwc = jnp.transpose(x_nchw, (0, 2, 3, 1))
    cols = [x_nhwc[:, kh:kh + Ho, kw:kw + Wo, :]
            for kh in range(KH) for kw in range(KW)]
    pf = jnp.concatenate(cols, axis=-1)                          # (N, Ho, Wo, K)
    groups = [jnp.transpose(pf[:, dh::2, dw::2, :].reshape(N, HWp, K), (0, 2, 1))
              for dh in range(2) for dw in range(2)]
    patches = jnp.stack(groups, axis=1)                          # (N, 4, K, HWp)

    wt = jnp.transpose(w_oihw, (0, 2, 3, 1)).reshape(Cout, K)    # (Cout, K)
    b2 = b.reshape(Cout, 1)

    flops = int(2 * N * 4 * Cout * K * HWp)
    bytes_accessed = int(4 * (patches.size + wt.size + b2.size + N * Cout * HWp))

    out = pl.pallas_call(
        _conv_relu_pool_kernel,
        out_shape=jax.ShapeDtypeStruct((N, Cout, HWp), jnp.float32),
        grid=(N,),
        in_specs=[
            pl.BlockSpec((1, 4, K, HWp), lambda n: (n, 0, 0, 0)),
            pl.BlockSpec((Cout, K), lambda n: (0, 0)),
            pl.BlockSpec((Cout, 1), lambda n: (0, 0)),
        ],
        out_specs=pl.BlockSpec((1, Cout, HWp), lambda n: (n, 0, 0)),
        compiler_params=pltpu.CompilerParams(dimension_semantics=("parallel",)),
        cost_estimate=pl.CostEstimate(flops=flops, transcendentals=0,
                                      bytes_accessed=bytes_accessed),
    )(patches, wt, b2)
    return out.reshape(N, Cout, Hp, Wp)                          # NCHW


def mlp_head(feat, fc1_w, fc1_b, fc2_w, fc2_b, fc3_w, fc3_b):
    """feat -> ReLU(fc1) -> ReLU(fc2) -> fc3 in a single fused Pallas kernel."""
    N, D = feat.shape
    w1, w2, w3 = fc1_w.T, fc2_w.T, fc3_w.T                       # (in, out)
    b1 = fc1_b.reshape(1, -1)
    b2 = fc2_b.reshape(1, -1)
    b3 = fc3_b.reshape(1, -1)
    H1, H2, H3 = w1.shape[1], w2.shape[1], w3.shape[1]

    flops = int(2 * N * (D * H1 + H1 * H2 + H2 * H3))
    bytes_accessed = int(4 * (feat.size + w1.size + w2.size + w3.size
                              + b1.size + b2.size + b3.size + N * H3))

    return pl.pallas_call(
        _mlp_kernel,
        out_shape=jax.ShapeDtypeStruct((N, H3), jnp.float32),
        grid=(1,),
        in_specs=[
            pl.BlockSpec((N, D), lambda i: (0, 0)),
            pl.BlockSpec((D, H1), lambda i: (0, 0)),
            pl.BlockSpec((1, H1), lambda i: (0, 0)),
            pl.BlockSpec((H1, H2), lambda i: (0, 0)),
            pl.BlockSpec((1, H2), lambda i: (0, 0)),
            pl.BlockSpec((H2, H3), lambda i: (0, 0)),
            pl.BlockSpec((1, H3), lambda i: (0, 0)),
        ],
        out_specs=pl.BlockSpec((N, H3), lambda i: (0, 0)),
        compiler_params=pltpu.CompilerParams(dimension_semantics=("arbitrary",)),
        cost_estimate=pl.CostEstimate(flops=flops, transcendentals=0,
                                      bytes_accessed=bytes_accessed),
    )(feat, w1, b1, w2, b2, w3, b3)


def _net_forward(x_nchw, params):
    """Forward of `Net`; input NCHW (N, 3, 32, 32) -> logits (N, 10)."""
    x = x_nchw.astype(jnp.float32)
    y = conv5x5_relu_pool(x, params["conv1_w"], params["conv1_b"])   # (N, 6, 14, 14)
    y = conv5x5_relu_pool(y, params["conv2_w"], params["conv2_b"])   # (N, 16, 5, 5)
    feat = y.reshape(y.shape[0], -1)      # channel-major flatten == PyTorch .view
    return mlp_head(feat, params["fc1_w"], params["fc1_b"],
                    params["fc2_w"], params["fc2_b"],
                    params["fc3_w"], params["fc3_b"])


# Single jitted executable: im2col glue fuses, weight re-layouts constant-fold,
# and the three pallas_calls launch from one program (dispatch overhead is the
# dominant cost at LeNet shapes).
net_forward = jax.jit(_net_forward)


# --------------------------- params & reference ---------------------------- #

def _uniform(key, shape, fan_in):
    bound = 1.0 / float(np.sqrt(fan_in))
    return jax.random.uniform(key, shape, jnp.float32, -bound, bound)


def init_params(key):
    ks = jax.random.split(key, 10)
    return {
        "conv1_w": _uniform(ks[0], (6, 3, 5, 5), 3 * 25),
        "conv1_b": _uniform(ks[1], (6,), 3 * 25),
        "conv2_w": _uniform(ks[2], (16, 6, 5, 5), 6 * 25),
        "conv2_b": _uniform(ks[3], (16,), 6 * 25),
        "fc1_w": _uniform(ks[4], (120, 400), 400),   # PyTorch (out, in) layout
        "fc1_b": _uniform(ks[5], (120,), 400),
        "fc2_w": _uniform(ks[6], (84, 120), 120),
        "fc2_b": _uniform(ks[7], (84,), 120),
        "fc3_w": _uniform(ks[8], (10, 84), 84),
        "fc3_b": _uniform(ks[9], (10,), 84),
    }


def ref_forward(x, params):
    """Pure-JAX reference matching PyTorch Net.forward."""
    def conv(x, w, b):
        y = lax.conv_general_dilated(
            x, w, (1, 1), "VALID",
            dimension_numbers=("NCHW", "OIHW", "NCHW"),
            precision=lax.Precision.HIGHEST)
        return y + b[None, :, None, None]

    def pool2(x):
        N, C, H, W = x.shape
        return x.reshape(N, C, H // 2, 2, W // 2, 2).max(axis=(3, 5))

    y = pool2(jax.nn.relu(conv(x, params["conv1_w"], params["conv1_b"])))
    y = pool2(jax.nn.relu(conv(y, params["conv2_w"], params["conv2_b"])))
    y = y.reshape(y.shape[0], -1)
    y = jax.nn.relu(y @ params["fc1_w"].T + params["fc1_b"])
    y = jax.nn.relu(y @ params["fc2_w"].T + params["fc2_b"])
    return y @ params["fc3_w"].T + params["fc3_b"]


# ---------------------------------- main ------------------------------------ #

if __name__ == "__main__":
    key = jax.random.PRNGKey(0)
    kx, kp = jax.random.split(key)

    N = 2
    x = jax.random.normal(kx, (N, 3, 32, 32), jnp.float32)   # NCHW, CIFAR-sized
    params = init_params(kp)

    out = net_forward(x, params)
    out = jax.block_until_ready(out)

    ref = ref_forward(x, params)
    assert out.shape == (N, 10), out.shape
    np.testing.assert_allclose(np.asarray(out), np.asarray(ref),
                               rtol=2e-2, atol=2e-2)
    print("KERNEL_OK")
</pallas_src>

<mosaic_0001>
module attributes {stable_mosaic.version = 11 : i64} {
  func.func @_conv_relu_pool_kernel(%arg0: i32, %arg1: memref<1x4x75x196xf32, #tpu.memory_space<vmem>>, %arg2: memref<6x75xf32, #tpu.memory_space<vmem>>, %arg3: memref<6x1xf32, #tpu.memory_space<vmem>>, %arg4: memref<1x6x196xf32, #tpu.memory_space<vmem>>) attributes {dimension_semantics = [#tpu.dimension_semantics<parallel>], iteration_bounds = array<i64: 2>, scalar_prefetch = 0 : i64, scratch_operands = 0 : i64, tpu.core_type = #tpu.core_type<tc>, window_params = [{transform_indices = @transform_0, window_bounds = array<i64: 1, 4, 75, 196>}, {pipeline_mode = #tpu.pipeline_mode<synchronous>, transform_indices = @transform_1, window_bounds = array<i64: 6, 75>}, {pipeline_mode = #tpu.pipeline_mode<synchronous>, transform_indices = @transform_2, window_bounds = array<i64: 6, 1>}, {transform_indices = @transform_3, window_bounds = array<i64: 1, 6, 196>}]} {
    %c0 = arith.constant 0 : index
    %c0_0 = arith.constant 0 : index
    %0 = vector.load %arg2[%c0, %c0_0] : memref<6x75xf32, #tpu.memory_space<vmem>>, vector<6x75xf32>
    %c0_1 = arith.constant 0 : index
    %c0_2 = arith.constant 0 : index
    %c0_3 = arith.constant 0 : index
    %c0_4 = arith.constant 0 : index
    %1 = vector.load %arg1[%c0_1, %c0_2, %c0_3, %c0_4] : memref<1x4x75x196xf32, #tpu.memory_space<vmem>>, vector<1x1x75x196xf32>
    %2 = vector.shape_cast %1 : vector<1x1x75x196xf32> to vector<75x196xf32>
    %cst = arith.constant dense<0.000000e+00> : vector<6x196xf32>
    %3 = tpu.matmul %0, %2, %cst {dimension_numbers = #tpu.dot_dimension_numbers<[1], [0], [0], [1], [0, 0, 1, 1], [], []>} : vector<6x75xf32>, vector<75x196xf32>, vector<6x196xf32> -> vector<6x196xf32>
    %c0_5 = arith.constant 0 : index
    %c1 = arith.constant 1 : index
    %c0_6 = arith.constant 0 : index
    %c0_7 = arith.constant 0 : index
    %4 = vector.load %arg1[%c0_5, %c1, %c0_6, %c0_7] : memref<1x4x75x196xf32, #tpu.memory_space<vmem>>, vector<1x1x75x196xf32>
    %5 = vector.shape_cast %4 : vector<1x1x75x196xf32> to vector<75x196xf32>
    %cst_8 = arith.constant dense<0.000000e+00> : vector<6x196xf32>
    %6 = tpu.matmul %0, %5, %cst_8 {dimension_numbers = #tpu.dot_dimension_numbers<[1], [0], [0], [1], [0, 0, 1, 1], [], []>} : vector<6x75xf32>, vector<75x196xf32>, vector<6x196xf32> -> vector<6x196xf32>
    %7 = arith.maximumf %3, %6 : vector<6x196xf32>
    %c0_9 = arith.constant 0 : index
    %c2 = arith.constant 2 : index
    %c0_10 = arith.constant 0 : index
    %c0_11 = arith.constant 0 : index
    %8 = vector.load %arg1[%c0_9, %c2, %c0_10, %c0_11] : memref<1x4x75x196xf32, #tpu.memory_space<vmem>>, vector<1x1x75x196xf32>
    %9 = vector.shape_cast %8 : vector<1x1x75x196xf32> to vector<75x196xf32>
    %cst_12 = arith.constant dense<0.000000e+00> : vector<6x196xf32>
    %10 = tpu.matmul %0, %9, %cst_12 {dimension_numbers = #tpu.dot_dimension_numbers<[1], [0], [0], [1], [0, 0, 1, 1], [], []>} : vector<6x75xf32>, vector<75x196xf32>, vector<6x196xf32> -> vector<6x196xf32>
    %11 = arith.maximumf %7, %10 : vector<6x196xf32>
    %c0_13 = arith.constant 0 : index
    %c3 = arith.constant 3 : index
    %c0_14 = arith.constant 0 : index
    %c0_15 = arith.constant 0 : index
    %12 = vector.load %arg1[%c0_13, %c3, %c0_14, %c0_15] : memref<1x4x75x196xf32, #tpu.memory_space<vmem>>, vector<1x1x75x196xf32>
    %13 = vector.shape_cast %12 : vector<1x1x75x196xf32> to vector<75x196xf32>
    %cst_16 = arith.constant dense<0.000000e+00> : vector<6x196xf32>
    %14 = tpu.matmul %0, %13, %cst_16 {dimension_numbers = #tpu.dot_dimension_numbers<[1], [0], [0], [1], [0, 0, 1, 1], [], []>} : vector<6x75xf32>, vector<75x196xf32>, vector<6x196xf32> -> vector<6x196xf32>
    %15 = arith.maximumf %11, %14 : vector<6x196xf32>
    %c0_17 = arith.constant 0 : index
    %c0_18 = arith.constant 0 : index
    %16 = vector.load %arg3[%c0_17, %c0_18] : memref<6x1xf32, #tpu.memory_space<vmem>>, vector<6x1xf32>
    %17 = vector.broadcast %16 : vector<6x1xf32> to vector<6x196xf32>
    %18 = arith.addf %15, %17 : vector<6x196xf32>
    %cst_19 = arith.constant 0.000000e+00 : f32
    %19 = vector.broadcast %cst_19 : f32 to vector<6x196xf32>
    %20 = arith.maximumf %18, %19 : vector<6x196xf32>
    %c0_20 = arith.constant 0 : index
    %c0_21 = arith.constant 0 : index
    %c0_22 = arith.constant 0 : index
    %21 = vector.load %arg4[%c0_20, %c0_21, %c0_22] : memref<1x6x196xf32, #tpu.memory_space<vmem>>, vector<1x6x196xf32>
    %22 = vector.shape_cast %21 : vector<1x6x196xf32> to vector<6x196xf32>
    %23 = vector.shape_cast %20 : vector<6x196xf32> to vector<1x6x196xf32>
    tpu.vector_store %arg4[%c0_20, %c0_21, %c0_22], %23 {strides = array<i32>} : memref<1x6x196xf32, #tpu.memory_space<vmem>>, vector<1x6x196xf32>,
    return
  }
  func.func @transform_0(%arg0: i32) -> (i32, i32, i32, i32) {
    %c0_i32 = arith.constant 0 : i32
    %c0_i32_0 = arith.constant 0 : i32
    %c0_i32_1 = arith.constant 0 : i32
    %c0_i32_2 = arith.constant 0 : i32
    return %arg0, %c0_i32, %c0_i32_0, %c0_i32_1 : i32, i32, i32, i32
  }
  func.func @transform_1(%arg0: i32) -> (i32, i32) {
    %c0_i32 = arith.constant 0 : i32
    %c0_i32_0 = arith.constant 0 : i32
    %c0_i32_1 = arith.constant 0 : i32
    return %c0_i32, %c0_i32_0 : i32, i32
  }
  func.func @transform_2(%arg0: i32) -> (i32, i32) {
    %c0_i32 = arith.constant 0 : i32
    %c0_i32_0 = arith.constant 0 : i32
    %c0_i32_1 = arith.constant 0 : i32
    return %c0_i32, %c0_i32_0 : i32, i32
  }
  func.func @transform_3(%arg0: i32) -> (i32, i32, i32) {
    %c0_i32 = arith.constant 0 : i32
    %c0_i32_0 = arith.constant 0 : i32
    %c0_i32_1 = arith.constant 0 : i32
    return %arg0, %c0_i32, %c0_i32_0 : i32, i32, i32
  }
}

module attributes {stable_mosaic.version = 11 : i64} {
  func.func @_conv_relu_pool_kernel(%arg0: i32, %arg1: memref<1x4x150x25xf32, #tpu.memory_space<vmem>>, %arg2: memref<16x150xf32, #tpu.memory_space<vmem>>, %arg3: memref<16x1xf32, #tpu.memory_space<vmem>>, %arg4: memref<1x16x25xf32, #tpu.memory_space<vmem>>) attributes {dimension_semantics = [#tpu.dimension_semantics<parallel>], iteration_bounds = array<i64: 2>, scalar_prefetch = 0 : i64, scratch_operands = 0 : i64, tpu.core_type = #tpu.core_type<tc>, window_params = [{transform_indices = @transform_0, window_bounds = array<i64: 1, 4, 150, 25>}, {pipeline_mode = #tpu.pipeline_mode<synchronous>, transform_indices = @transform_1, window_bounds = array<i64: 16, 150>}, {pipeline_mode = #tpu.pipeline_mode<synchronous>, transform_indices = @transform_2, window_bounds = array<i64: 16, 1>}, {transform_indices = @transform_3, window_bounds = array<i64: 1, 16, 25>}]} {
    %c0 = arith.constant 0 : index
    %c0_0 = arith.constant 0 : index
    %0 = vector.load %arg2[%c0, %c0_0] : memref<16x150xf32, #tpu.memory_space<vmem>>, vector<16x150xf32>
    %c0_1 = arith.constant 0 : index
    %c0_2 = arith.constant 0 : index
    %c0_3 = arith.constant 0 : index
    %c0_4 = arith.constant 0 : index
    %1 = vector.load %arg1[%c0_1, %c0_2, %c0_3, %c0_4] : memref<1x4x150x25xf32, #tpu.memory_space<vmem>>, vector<1x1x150x25xf32>
    %2 = vector.shape_cast %1 : vector<1x1x150x25xf32> to vector<150x25xf32>
    %cst = arith.constant dense<0.000000e+00> : vector<16x25xf32>
    %3 = tpu.matmul %0, %2, %cst {dimension_numbers = #tpu.dot_dimension_numbers<[1], [0], [0], [1], [0, 0, 1, 1], [], []>} : vector<16x150xf32>, vector<150x25xf32>, vector<16x25xf32> -> vector<16x25xf32>
    %c0_5 = arith.constant 0 : index
    %c1 = arith.constant 1 : index
    %c0_6 = arith.constant 0 : index
    %c0_7 = arith.constant 0 : index
    %4 = vector.load %arg1[%c0_5, %c1, %c0_6, %c0_7] : memref<1x4x150x25xf32, #tpu.memory_space<vmem>>, vector<1x1x150x25xf32>
    %5 = vector.shape_cast %4 : vector<1x1x150x25xf32> to vector<150x25xf32>
    %cst_8 = arith.constant dense<0.000000e+00> : vector<16x25xf32>
    %6 = tpu.matmul %0, %5, %cst_8 {dimension_numbers = #tpu.dot_dimension_numbers<[1], [0], [0], [1], [0, 0, 1, 1], [], []>} : vector<16x150xf32>, vector<150x25xf32>, vector<16x25xf32> -> vector<16x25xf32>
    %7 = arith.maximumf %3, %6 : vector<16x25xf32>
    %c0_9 = arith.constant 0 : index
    %c2 = arith.constant 2 : index
    %c0_10 = arith.constant 0 : index
    %c0_11 = arith.constant 0 : index
    %8 = vector.load %arg1[%c0_9, %c2, %c0_10, %c0_11] : memref<1x4x150x25xf32, #tpu.memory_space<vmem>>, vector<1x1x150x25xf32>
    %9 = vector.shape_cast %8 : vector<1x1x150x25xf32> to vector<150x25xf32>
    %cst_12 = arith.constant dense<0.000000e+00> : vector<16x25xf32>
    %10 = tpu.matmul %0, %9, %cst_12 {dimension_numbers = #tpu.dot_dimension_numbers<[1], [0], [0], [1], [0, 0, 1, 1], [], []>} : vector<16x150xf32>, vector<150x25xf32>, vector<16x25xf32> -> vector<16x25xf32>
    %11 = arith.maximumf %7, %10 : vector<16x25xf32>
    %c0_13 = arith.constant 0 : index
    %c3 = arith.constant 3 : index
    %c0_14 = arith.constant 0 : index
    %c0_15 = arith.constant 0 : index
    %12 = vector.load %arg1[%c0_13, %c3, %c0_14, %c0_15] : memref<1x4x150x25xf32, #tpu.memory_space<vmem>>, vector<1x1x150x25xf32>
    %13 = vector.shape_cast %12 : vector<1x1x150x25xf32> to vector<150x25xf32>
    %cst_16 = arith.constant dense<0.000000e+00> : vector<16x25xf32>
    %14 = tpu.matmul %0, %13, %cst_16 {dimension_numbers = #tpu.dot_dimension_numbers<[1], [0], [0], [1], [0, 0, 1, 1], [], []>} : vector<16x150xf32>, vector<150x25xf32>, vector<16x25xf32> -> vector<16x25xf32>
    %15 = arith.maximumf %11, %14 : vector<16x25xf32>
    %c0_17 = arith.constant 0 : index
    %c0_18 = arith.constant 0 : index
    %16 = vector.load %arg3[%c0_17, %c0_18] : memref<16x1xf32, #tpu.memory_space<vmem>>, vector<16x1xf32>
    %17 = vector.broadcast %16 : vector<16x1xf32> to vector<16x25xf32>
    %18 = arith.addf %15, %17 : vector<16x25xf32>
    %cst_19 = arith.constant 0.000000e+00 : f32
    %19 = vector.broadcast %cst_19 : f32 to vector<16x25xf32>
    %20 = arith.maximumf %18, %19 : vector<16x25xf32>
    %c0_20 = arith.constant 0 : index
    %c0_21 = arith.constant 0 : index
    %c0_22 = arith.constant 0 : index
    %21 = vector.load %arg4[%c0_20, %c0_21, %c0_22] : memref<1x16x25xf32, #tpu.memory_space<vmem>>, vector<1x16x25xf32>
    %22 = vector.shape_cast %21 : vector<1x16x25xf32> to vector<16x25xf32>
    %23 = vector.shape_cast %20 : vector<16x25xf32> to vector<1x16x25xf32>
    tpu.vector_store %arg4[%c0_20, %c0_21, %c0_22], %23 {strides = array<i32>} : memref<1x16x25xf32, #tpu.memory_space<vmem>>, vector<1x16x25xf32>,
    return
  }
  func.func @transform_0(%arg0: i32) -> (i32, i32, i32, i32) {
    %c0_i32 = arith.constant 0 : i32
    %c0_i32_0 = arith.constant 0 : i32
    %c0_i32_1 = arith.constant 0 : i32
    %c0_i32_2 = arith.constant 0 : i32
    return %arg0, %c0_i32, %c0_i32_0, %c0_i32_1 : i32, i32, i32, i32
  }
  func.func @transform_1(%arg0: i32) -> (i32, i32) {
    %c0_i32 = arith.constant 0 : i32
    %c0_i32_0 = arith.constant 0 : i32
    %c0_i32_1 = arith.constant 0 : i32
    return %c0_i32, %c0_i32_0 : i32, i32
  }
  func.func @transform_2(%arg0: i32) -> (i32, i32) {
    %c0_i32 = arith.constant 0 : i32
    %c0_i32_0 = arith.constant 0 : i32
    %c0_i32_1 = arith.constant 0 : i32
    return %c0_i32, %c0_i32_0 : i32, i32
  }
  func.func @transform_3(%arg0: i32) -> (i32, i32, i32) {
    %c0_i32 = arith.constant 0 : i32
    %c0_i32_0 = arith.constant 0 : i32
    %c0_i32_1 = arith.constant 0 : i32
    return %arg0, %c0_i32, %c0_i32_0 : i32, i32, i32
  }
}

module attributes {stable_mosaic.version = 11 : i64} {
  func.func @_mlp_kernel(%arg0: i32, %arg1: memref<2x400xf32, #tpu.memory_space<vmem>>, %arg2: memref<400x120xf32, #tpu.memory_space<vmem>>, %arg3: memref<1x120xf32, #tpu.memory_space<vmem>>, %arg4: memref<120x84xf32, #tpu.memory_space<vmem>>, %arg5: memref<1x84xf32, #tpu.memory_space<vmem>>, %arg6: memref<84x10xf32, #tpu.memory_space<vmem>>, %arg7: memref<1x10xf32, #tpu.memory_space<vmem>>, %arg8: memref<2x10xf32, #tpu.memory_space<vmem>>) attributes {dimension_semantics = [#tpu.dimension_semantics<arbitrary>], iteration_bounds = array<i64: 1>, scalar_prefetch = 0 : i64, scratch_operands = 0 : i64, tpu.core_type = #tpu.core_type<tc>, window_params = [{pipeline_mode = #tpu.pipeline_mode<synchronous>, transform_indices = @transform_0, window_bounds = array<i64: 2, 400>}, {pipeline_mode = #tpu.pipeline_mode<synchronous>, transform_indices = @transform_1, window_bounds = array<i64: 400, 120>}, {pipeline_mode = #tpu.pipeline_mode<synchronous>, transform_indices = @transform_2, window_bounds = array<i64: 1, 120>}, {pipeline_mode = #tpu.pipeline_mode<synchronous>, transform_indices = @transform_3, window_bounds = array<i64: 120, 84>}, {pipeline_mode = #tpu.pipeline_mode<synchronous>, transform_indices = @transform_4, window_bounds = array<i64: 1, 84>}, {pipeline_mode = #tpu.pipeline_mode<synchronous>, transform_indices = @transform_5, window_bounds = array<i64: 84, 10>}, {pipeline_mode = #tpu.pipeline_mode<synchronous>, transform_indices = @transform_6, window_bounds = array<i64: 1, 10>}, {pipeline_mode = #tpu.pipeline_mode<synchronous>, transform_indices = @transform_7, window_bounds = array<i64: 2, 10>}]} {
    %c0 = arith.constant 0 : index
    %c0_0 = arith.constant 0 : index
    %0 = vector.load %arg1[%c0, %c0_0] : memref<2x400xf32, #tpu.memory_space<vmem>>, vector<2x400xf32>
    %c0_1 = arith.constant 0 : index
    %c0_2 = arith.constant 0 : index
    %1 = vector.load %arg2[%c0_1, %c0_2] : memref<400x120xf32, #tpu.memory_space<vmem>>, vector<400x120xf32>
    %cst = arith.constant dense<0.000000e+00> : vector<2x120xf32>
    %2 = tpu.matmul %0, %1, %cst {dimension_numbers = #tpu.dot_dimension_numbers<[1], [0], [0], [1], [0, 0, 1, 1], [], []>} : vector<2x400xf32>, vector<400x120xf32>, vector<2x120xf32> -> vector<2x120xf32>
    %c0_3 = arith.constant 0 : index
    %c0_4 = arith.constant 0 : index
    %3 = vector.load %arg3[%c0_3, %c0_4] : memref<1x120xf32, #tpu.memory_space<vmem>>, vector<1x120xf32>
    %4 = vector.broadcast %3 : vector<1x120xf32> to vector<2x120xf32>
    %5 = arith.addf %2, %4 : vector<2x120xf32>
    %cst_5 = arith.constant 0.000000e+00 : f32
    %6 = vector.broadcast %cst_5 : f32 to vector<2x120xf32>
    %7 = arith.maximumf %5, %6 : vector<2x120xf32>
    %c0_6 = arith.constant 0 : index
    %c0_7 = arith.constant 0 : index
    %8 = vector.load %arg4[%c0_6, %c0_7] : memref<120x84xf32, #tpu.memory_space<vmem>>, vector<120x84xf32>
    %cst_8 = arith.constant dense<0.000000e+00> : vector<2x84xf32>
    %9 = tpu.matmul %7, %8, %cst_8 {dimension_numbers = #tpu.dot_dimension_numbers<[1], [0], [0], [1], [0, 0, 1, 1], [], []>} : vector<2x120xf32>, vector<120x84xf32>, vector<2x84xf32> -> vector<2x84xf32>
    %c0_9 = arith.constant 0 : index
    %c0_10 = arith.constant 0 : index
    %10 = vector.load %arg5[%c0_9, %c0_10] : memref<1x84xf32, #tpu.memory_space<vmem>>, vector<1x84xf32>
    %11 = vector.broadcast %10 : vector<1x84xf32> to vector<2x84xf32>
    %12 = arith.addf %9, %11 : vector<2x84xf32>
    %cst_11 = arith.constant 0.000000e+00 : f32
    %13 = vector.broadcast %cst_11 : f32 to vector<2x84xf32>
    %14 = arith.maximumf %12, %13 : vector<2x84xf32>
    %c0_12 = arith.constant 0 : index
    %c0_13 = arith.constant 0 : index
    %15 = vector.load %arg6[%c0_12, %c0_13] : memref<84x10xf32, #tpu.memory_space<vmem>>, vector<84x10xf32>
    %cst_14 = arith.constant dense<0.000000e+00> : vector<2x10xf32>
    %16 = tpu.matmul %14, %15, %cst_14 {dimension_numbers = #tpu.dot_dimension_numbers<[1], [0], [0], [1], [0, 0, 1, 1], [], []>} : vector<2x84xf32>, vector<84x10xf32>, vector<2x10xf32> -> vector<2x10xf32>
    %c0_15 = arith.constant 0 : index
    %c0_16 = arith.constant 0 : index
    %17 = vector.load %arg7[%c0_15, %c0_16] : memref<1x10xf32, #tpu.memory_space<vmem>>, vector<1x10xf32>
    %18 = vector.broadcast %17 : vector<1x10xf32> to vector<2x10xf32>
    %19 = arith.addf %16, %18 : vector<2x10xf32>
    %c0_17 = arith.constant 0 : index
    %c0_18 = arith.constant 0 : index
    %20 = vector.load %arg8[%c0_17, %c0_18] : memref<2x10xf32, #tpu.memory_space<vmem>>, vector<2x10xf32>
    tpu.vector_store %arg8[%c0_17, %c0_18], %19 {strides = array<i32>} : memref<2x10xf32, #tpu.memory_space<vmem>>, vector<2x10xf32>,
    return
  }
  func.func @transform_0(%arg0: i32) -> (i32, i32) {
    %c0_i32 = arith.constant 0 : i32
    %c0_i32_0 = arith.constant 0 : i32
    %c0_i32_1 = arith.constant 0 : i32
    return %c0_i32, %c0_i32_0 : i32, i32
  }
  func.func @transform_1(%arg0: i32) -> (i32, i32) {
    %c0_i32 = arith.constant 0 : i32
    %c0_i32_0 = arith.constant 0 : i32
    %c0_i32_1 = arith.constant 0 : i32
    return %c0_i32, %c0_i32_0 : i32, i32
  }
  func.func @transform_2(%arg0: i32) -> (i32, i32) {
    %c0_i32 = arith.constant 0 : i32
    %c0_i32_0 = arith.constant 0 : i32
    %c0_i32_1 = arith.constant 0 : i32
    return %c0_i32, %c0_i32_0 : i32, i32
  }
  func.func @transform_3(%arg0: i32) -> (i32, i32) {
    %c0_i32 = arith.constant 0 : i32
    %c0_i32_0 = arith.constant 0 : i32
    %c0_i32_1 = arith.constant 0 : i32
    return %c0_i32, %c0_i32_0 : i32, i32
  }
  func.func @transform_4(%arg0: i32) -> (i32, i32) {
    %c0_i32 = arith.constant 0 : i32
    %c0_i32_0 = arith.constant 0 : i32
    %c0_i32_1 = arith.constant 0 : i32
    return %c0_i32, %c0_i32_0 : i32, i32
  }
  func.func @transform_5(%arg0: i32) -> (i32, i32) {
    %c0_i32 = arith.constant 0 : i32
    %c0_i32_0 = arith.constant 0 : i32
    %c0_i32_1 = arith.constant 0 : i32
    return %c0_i32, %c0_i32_0 : i32, i32
  }
  func.func @transform_6(%arg0: i32) -> (i32, i32) {
    %c0_i32 = arith.constant 0 : i32
    %c0_i32_0 = arith.constant 0 : i32
    %c0_i32_1 = arith.constant 0 : i32
    return %c0_i32, %c0_i32_0 : i32, i32
  }
  func.func @transform_7(%arg0: i32) -> (i32, i32) {
    %c0_i32 = arith.constant 0 : i32
    %c0_i32_0 = arith.constant 0 : i32
    %c0_i32_1 = arith.constant 0 : i32
    return %c0_i32, %c0_i32_0 : i32, i32
  }
}

</mosaic_0001>

<llo_original>
// kernel: _net_forward.3
$region0: #{_net_forward.3}
  #allocation0 [shape = 'u32[]', space=smem, size = 0x4, offset = 0x4, fixed_abs, tag = 'smem constant byte address 0x4 - core index']
  #allocation1 [shape = 'u32[144,128]{1,0:T(1,128)}', space=vmem, size = 0x12000, scoped, tag = 'internal scratch']
  %s0 = inlined_call_operand.vmem [shape: f32[2,4,75,196], index: 0, kind: input, shape index: {}]
  %s1 = inlined_call_operand.vmem [shape: f32[6,75], index: 1, kind: input, shape index: {}]
  %s2 = inlined_call_operand.vmem [shape: f32[6,1], index: 2, kind: input, shape index: {}]
  %s3 = inlined_call_operand.vmem [shape: f32[2,6,196], index: 3, kind: output, shape index: {}]
  %s4 = sld [smem:[#allocation0]]
  $region45: #{_net_forward.3} parent=0
    _
  %s6 = ssub.s32 1, %s4
  %s7 = scalar_select 0, %s6, %s4
  loop: start=0, step=1, limit=4
  $region2: #{_net_forward.3} parent=0 // loop_pre_header
    _
  $region3: #{_net_forward.3} parent=0 // loop_header
    %s9 = sphi 0, %s13
    %p10 = scmp.ge.s32.totalorder %s9, 4
    %s19 = sphi 0, %s21
    %s22 = sphi 0, %s19
    %s23 = sphi 0, %s22
    %s39 = sphi 0, %s23
    %s43 = sphi 0, %s43
    %s45 = sphi 0, %s43
    %s46 = sphi 0, %s45
    %s60 = sphi 0, %s46
    %s64 = sphi 0, %s64
    %s66 = sphi 0, %s64
    %s67 = sphi 0, %s66
    %s81 = sphi 0, %s67
    %s87 = sphi 0, %s89
    %s90 = sphi 0, %s87
    %s91 = sphi 0, %s90
    %s107 = sphi 0, %s91
  $region4: #{_net_forward.3} parent=0 // loop_header_branch
    %12 = sbr.rel (%p10) target = $region8
  $region5: #{_net_forward.3} parent=0 // loop_body
    %s14 = ssub.s32 %s9, 1
    %s15 = ssub.s32 %s9, 2
    %s16 = sadd.s32 %s9, 1
    %s17 = ssub.s32 %s9, %s16
    %p18 = scmp.eq.s32.totalorder %s17, 0
    %s20 = sadd.s32 %s19, 1
    %s21 = scalar_select %p18, %s19, %s20
    %p24 = pneg %p18
    %p25 = scmp.eq.s32.totalorder %s9, 1
    %p26 = por %p24, %p25
    %p27 = scmp.ne.s32.totalorder %s19, %s22
    %p28 = scmp.eq.s32.totalorder %s9, 0
    %p29 = por %p27, %p28
    %p30 = scmp.ne.s32.totalorder %s19, %s22
    %p31 = scmp.eq.s32.totalorder %s14, 1
    %p32 = por %p30, %p31
    %p33 = scmp.ne.s32.totalorder %s22, %s23
    %p34 = scmp.eq.s32.totalorder %s14, 0
    %p35 = por %p33, %p34
    %p36 = scmp.ne.s32.totalorder %s22, %s23
    %p37 = scmp.eq.s32.totalorder %s15, 1
    %p38 = por %p36, %p37
    %p40 = scmp.ne.s32.totalorder %s23, %s39
    %p41 = scmp.eq.s32.totalorder %s15, 0
    %p42 = por %p40, %p41
    %s44 = sadd.s32 %s43, 1
    %p47 = scmp.eq.s32.totalorder %s9, 1
    %p48 = scmp.ne.s32.totalorder %s43, %s45
    %p49 = scmp.eq.s32.totalorder %s9, 0
    %p50 = por %p48, %p49
    %p51 = scmp.ne.s32.totalorder %s43, %s45
    %p52 = scmp.eq.s32.totalorder %s14, 1
    %p53 = por %p51, %p52
    %p54 = scmp.ne.s32.totalorder %s45, %s46
    %p55 = scmp.eq.s32.totalorder %s14, 0
    %p56 = por %p54, %p55
    %p57 = scmp.ne.s32.totalorder %s45, %s46
    %p58 = scmp.eq.s32.totalorder %s15, 1
    %p59 = por %p57, %p58
    %p61 = scmp.ne.s32.totalorder %s46, %s60
    %p62 = scmp.eq.s32.totalorder %s15, 0
    %p63 = por %p61, %p62
    %s65 = sadd.s32 %s64, 1
    %p68 = scmp.eq.s32.totalorder %s9, 1
    %p69 = scmp.ne.s32.totalorder %s64, %s66
    %p70 = scmp.eq.s32.totalorder %s9, 0
    %p71 = por %p69, %p70
    %p72 = scmp.ne.s32.totalorder %s64, %s66
    %p73 = scmp.eq.s32.totalorder %s14, 1
    %p74 = por %p72, %p73
    %p75 = scmp.ne.s32.totalorder %s66, %s67
    %p76 = scmp.eq.s32.totalorder %s14, 0
    %p77 = por %p75, %p76
    %p78 = scmp.ne.s32.totalorder %s66, %s67
    %p79 = scmp.eq.s32.totalorder %s15, 1
    %p80 = por %p78, %p79
    %p82 = scmp.ne.s32.totalorder %s67, %s81
    %p83 = scmp.eq.s32.totalorder %s15, 0
    %p84 = por %p82, %p83
    %s85 = ssub.s32 %s9, %s16
    %p86 = scmp.eq.s32.totalorder %s85, 0
    %s88 = sadd.s32 %s87, 1
    %s89 = scalar_select %p86, %s87, %s88
    %p92 = pneg %p86
    %p93 = scmp.eq.s32.totalorder %s9, 1
    %p94 = por %p92, %p93
    %p95 = scmp.ne.s32.totalorder %s87, %s90
    %p96 = scmp.eq.s32.totalorder %s9, 0
    %p97 = por %p95, %p96
    %p98 = scmp.ne.s32.totalorder %s87, %s90
    %p99 = scmp.eq.s32.totalorder %s14, 1
    %p100 = por %p98, %p99
    %p101 = scmp.ne.s32.totalorder %s90, %s91
    %p102 = scmp.eq.s32.totalorder %s14, 0
    %p103 = por %p101, %p102
    %p104 = scmp.ne.s32.totalorder %s90, %s91
    %p105 = scmp.eq.s32.totalorder %s15, 1
    %p106 = por %p104, %p105
    %p108 = scmp.ne.s32.totalorder %s91, %s107
    %p109 = scmp.eq.s32.totalorder %s15, 0
    %p110 = por %p108, %p109
    %p111 = scmp.le.s32.totalorder 1, %s9
    %p112 = scmp.lt.s32.totalorder %s9, 3
    %p113 = pnand %p111, %p112
    %p114 = pneg %p113
    // Predicated region
    $region9: #{_net_forward.3} parent=5 // pred_check
      _
    $region10: #{_net_forward.3} parent=5 // pred_check_branch
      %116 = sbr.rel (%p113) target = $region12
    $region11: #{_net_forward.3} parent=5 // pred_region
      %s117 = ssub.s32 %s9, 1
      // Predicated region
      $region13: #{_net_forward.3} parent=11 // pred_check
        %p118 = pneg %p56
      $region14: #{_net_forward.3} parent=11 // pred_check_branch
        %120 = sbr.rel (%p118) target = $region16
      $region15: #{_net_forward.3} parent=11 // pred_region
        _
      $region16: #{_net_forward.3} parent=11 // pred_fallthru
        _
      // Predicated region
      $region17: #{_net_forward.3} parent=11 // pred_check
        %p121 = pneg %p77
      $region18: #{_net_forward.3} parent=11 // pred_check_branch
        %123 = sbr.rel (%p121) target = $region20
      $region19: #{_net_forward.3} parent=11 // pred_region
        _
      $region20: #{_net_forward.3} parent=11 // pred_fallthru
        _
    $region12: #{_net_forward.3} parent=5 // pred_fallthru
      _
    %p124 = scmp.lt.s32.totalorder %s9, 2
    // Predicated region
    $region21: #{_net_forward.3} parent=5 // pred_check
      %p125 = pneg %p124
    $region22: #{_net_forward.3} parent=5 // pred_check_branch
      %127 = sbr.rel (%p125) target = $region24
    $region23: #{_net_forward.3} parent=5 // pred_region
      // Predicated region
      $region25: #{_net_forward.3} parent=23 // pred_check
        %p128 = pneg %p29
      $region26: #{_net_forward.3} parent=23 // pred_check_branch
        %130 = sbr.rel (%p128) target = $region28
      $region27: #{_net_forward.3} parent=23 // pred_region
        %p131 = scmp.lt.s32.totalorder %s9, 1
        %s132 = scalar_select %p131, %s9, 1
        %s133 = smul.addr %s132, 80
        %s134 = smul.addr %s133, 8
        %s135 = scalar_lea.vmem %s0, %s134
      $region28: #{_net_forward.3} parent=23 // pred_fallthru
        _
    $region24: #{_net_forward.3} parent=5 // pred_fallthru
      _
    %p136 = scmp.le.s32.totalorder 1, %s9
    %p137 = scmp.lt.s32.totalorder %s9, 3
    %p138 = pnand %p136, %p137
    %p139 = pneg %p138
    // Predicated region
    $region29: #{_net_forward.3} parent=5 // pred_check
      _
    $region30: #{_net_forward.3} parent=5 // pred_check_branch
      %141 = sbr.rel (%p138) target = $region32
    $region31: #{_net_forward.3} parent=5 // pred_region
      %s142 = ssub.s32 %s9, 1
      %p143 = scmp.lt.s32.totalorder %s14, 1
      %s144 = scalar_select %p143, %s14, 1
      %s145 = smul.addr %s144, 80
      %s146 = smul.addr %s145, 8
      %s147 = scalar_lea.vmem %s0, %s146
      %p148 = pneg %p35
      %p149 = pneg %p32
      %p150 = pneg %p56
      %p151 = pneg %p53
      %p152 = pneg %p77
      %p153 = pneg %p74
      %p154 = pneg %p103
      %p155 = pneg %p100
      %p156 = scmp.lt.s32.totalorder %s14, 1
      %s157 = scalar_select %p156, %s14, 1
      %s158 = smul.addr %s157, 2
      %s159 = smul.addr %s158, 8
      %s160 = scalar_lea.vmem %s3, %s159
      %p161 = scmp.lt.s32.totalorder %s14, 1
      %s162 = scalar_select %p161, %s14, 1
      %s163 = smul.addr %s162, 80
      %s164 = smul.addr %s163, 8
      %s165 = scalar_lea.vmem %s0, %s164
      %p166 = scmp.lt.s32.totalorder %s14, 1
      %s167 = scalar_select %p166, %s14, 1
      %s168 = smul.addr %s167, 2
      %s169 = smul.addr %s168, 8
      %s170 = scalar_lea.vmem %s3, %s169
      %v171 = vld [vmem:[%s1] sm:$0x3f]
      %v172 = vld [vmem:[%s165] sm:$0xff]
      %v173 = vld [vmem:[%s165 + $0x8] sm:$0xff]
      %v174 = vld [vmem:[%s165 + $0x10] sm:$0xff]
      %v175 = vld [vmem:[%s165 + $0x18] sm:$0xff]
      %v176 = vld [vmem:[%s165 + $0x20] sm:$0xff]
      %v177 = vld [vmem:[%s165 + $0x28] sm:$0xff]
      %v178 = vld [vmem:[%s165 + $0x30] sm:$0xff]
      %v179 = vld [vmem:[%s165 + $0x38] sm:$0xff]
      %v180 = vld [vmem:[%s165 + $0x40] sm:$0xff]
      %v181 = vld [vmem:[%s165 + $0x48] sm:$0xff]
      %v182 = vld [vmem:[%s165 + $0x50] sm:$0xff]
      %v183 = vld [vmem:[%s165 + $0x58] sm:$0xff]
      %v184 = vld [vmem:[%s165 + $0x60] sm:$0xff]
      %v185 = vld [vmem:[%s165 + $0x68] sm:$0xff]
      %v186 = vld [vmem:[%s165 + $0x70] sm:$0xff]
      %v187 = vld [vmem:[%s165 + $0x78] sm:$0xff]
      %v188 = vld [vmem:[%s165 + $0x80] sm:$0xff]
      %v189 = vld [vmem:[%s165 + $0x88] sm:$0xff]
      %v190 = vld [vmem:[%s165 + $0x90] sm:$0x7]
      %v191 = vld [vmem:[%s165 + $0x98] sm:$0x7]
      %vm192 = vcmask 613376
      %v194 = vsel %vm192, %v171, 0
      %vm196 = vcmask 1042432
      %v198 = vsel %vm196, %v190, 0
      %v201 = vsel %vm196, %v191, 0
      %203 = vmatprep.subr.mxu0 %v173
      %204 = vmatpush1.msra.mxu0 %v172
      %205 = vmatprep.subr.mxu0 %v175
      %206 = vmatpush1.msra.mxu0 %v174
      %207 = vmatprep.subr.mxu0 %v177
      %208 = vmatpush1.msra.mxu0 %v176
      %209 = vmatprep.subr.mxu0 %v179
      %210 = vmatpush1.msra.mxu0 %v178
      %211 = vmatprep.subr.mxu0 %v181
      %212 = vmatpush1.msra.mxu0 %v180
      %213 = vmatprep.subr.mxu0 %v183
      %214 = vmatpush1.msra.mxu0 %v182
      %215 = vmatprep.subr.mxu0 %v185
      %216 = vmatpush1.msra.mxu0 %v184
      %217 = vmatprep.subr.mxu0 %v187
      %218 = vmatpush1.msra.mxu0 %v186
      %219 = vmatprep.subr.mxu0 %v189
      %220 = vmatpush1.msra.mxu0 %v188
      %221 = vmatprep.subr.mxu0 %v201
      %222 = vmatpush1.msra.mxu0 %v198
      %223 = vmatprep.subr.mxu0 0.0
      %224 = vmatpush1.msra.mxu0 0.0
      %225 = vmatprep.subr.mxu0 0.0
      %226 = vmatpush1.msra.mxu0 0.0
      %227 = vmatprep.subr.mxu0 0.0
      %228 = vmatpush1.msra.mxu0 0.0
      %229 = vmatprep.subr.mxu0 0.0
      %230 = vmatpush1.msra.mxu0 0.0
      %231 = vmatprep.subr.mxu0 0.0
      %232 = vmatpush1.msra.mxu0 0.0
      %233 = vmatprep.subr.mxu0 0.0
      %234 = vmatpush1.msra.mxu0 0.0
      %235 = vmatprep.subr.mxu0 0.0
      %236 = vmatpush1.msra.mxu0 0.0
      %237 = vmatprep.subr.mxu0 0.0
      %238 = vmatpush1.msra.mxu0 0.0
      %239 = vmatprep.subr.mxu0 0.0
      %240 = vmatpush1.msra.mxu0 0.0
      %241 = vmatprep.subr.mxu0 0.0
      %242 = vmatpush1.msra.mxu0 0.0
      %243 = vmatprep.subr.mxu0 0.0
      %244 = vmatpush1.msra.mxu0 0.0
      %245 = vmatprep.subr.mxu0 0.0
      %246 = vmatpush1.msra.mxu0 0.0
      %247 = vmatprep.subr.mxu0 0.0
      %248 = vmatpush1.msra.mxu0 0.0
      %249 = vmatprep.subr.mxu0 0.0
      %250 = vmatpush1.msra.mxu0 0.0
      %251 = vmatprep.subr.mxu0 0.0
      %252 = vmatpush1.msra.mxu0 0.0
      %253 = vmatprep.subr.mxu0 0.0
      %254 = vmatpush1.msra.mxu0 0.0
      %255 = vmatprep.subr.mxu0 0.0
      %256 = vmatpush1.msra.mxu0 0.0
      %257 = vmatprep.subr.mxu0 0.0
      %258 = vmatpush1.msra.mxu0 0.0
      %259 = vmatprep.subr.mxu0 0.0
      %260 = vmatpush1.msra.mxu0 0.0
      %261 = vmatprep.subr.mxu0 0.0
      %262 = vmatpush1.msra.mxu0 0.0
      %263 = vmatprep.subr.mxu0 0.0
      %264 = vmatpush1.msra.mxu0 0.0
      %265 = vmatprep.subr.mxu0 0.0
      %266 = vmatpush1.msra.mxu0 0.0
      %267 = vmatprep.mubr.f32.mxu0 0.0
      %268 = vmatmul.mubr.f32.gmra.mrb[0].mxu0 %v194
      %v269 = vpop.f32.mrb[0].mxu0
      %v270 = vadd.f32 0.0, %v269
      %v271 = vpop.f32.mrb[0].mxu0
      %v272 = vadd.f32 0.0, %v271
      %273 = vdwg.mxu0
      %s274 = scalar_lea.vmem %s165, 160
      %v275 = vld [vmem:[%s274] sm:$0xff]
      %v276 = vld [vmem:[%s274 + $0x8] sm:$0xff]
      %v277 = vld [vmem:[%s274 + $0x10] sm:$0xff]
      %v278 = vld [vmem:[%s274 + $0x18] sm:$0xff]
      %v279 = vld [vmem:[%s274 + $0x20] sm:$0xff]
      %v280 = vld [vmem:[%s274 + $0x28] sm:$0xff]
      %v281 = vld [vmem:[%s274 + $0x30] sm:$0xff]
      %v282 = vld [vmem:[%s274 + $0x38] sm:$0xff]
      %v283 = vld [vmem:[%s274 + $0x40] sm:$0xff]
      %v284 = vld [vmem:[%s274 + $0x48] sm:$0xff]
      %v285 = vld [vmem:[%s274 + $0x50] sm:$0xff]
      %v286 = vld [vmem:[%s274 + $0x58] sm:$0xff]
      %v287 = vld [vmem:[%s274 + $0x60] sm:$0xff]
      %v288 = vld [vmem:[%s274 + $0x68] sm:$0xff]
      %v289 = vld [vmem:[%s274 + $0x70] sm:$0xff]
      %v290 = vld [vmem:[%s274 + $0x78] sm:$0xff]
      %v291 = vld [vmem:[%s274 + $0x80] sm:$0xff]
      %v292 = vld [vmem:[%s274 + $0x88] sm:$0xff]
      %v293 = vld [vmem:[%s274 + $0x90] sm:$0x7]
      %v294 = vld [vmem:[%s274 + $0x98] sm:$0x7]
      %v296 = vsel %vm196, %v293, 0
      %v299 = vsel %vm196, %v294, 0
      %301 = vmatprep.subr.mxu0 %v276
      %302 = vmatpush1.msra.mxu0 %v275
      %303 = vmatprep.subr.mxu0 %v278
      %304 = vmatpush1.msra.mxu0 %v277
      %305 = vmatprep.subr.mxu0 %v280
      %306 = vmatpush1.msra.mxu0 %v279
      %307 = vmatprep.subr.mxu0 %v282
      %308 = vmatpush1.msra.mxu0 %v281
      %309 = vmatprep.subr.mxu0 %v284
      %310 = vmatpush1.msra.mxu0 %v283
      %311 = vmatprep.subr.mxu0 %v286
      %312 = vmatpush1.msra.mxu0 %v285
      %313 = vmatprep.subr.mxu0 %v288
      %314 = vmatpush1.msra.mxu0 %v287
      %315 = vmatprep.subr.mxu0 %v290
      %316 = vmatpush1.msra.mxu0 %v289
      %317 = vmatprep.subr.mxu0 %v292
      %318 = vmatpush1.msra.mxu0 %v291
      %319 = vmatprep.subr.mxu0 %v299
      %320 = vmatpush1.msra.mxu0 %v296
      %321 = vmatprep.subr.mxu0 0.0
      %322 = vmatpush1.msra.mxu0 0.0
      %323 = vmatprep.subr.mxu0 0.0
      %324 = vmatpush1.msra.mxu0 0.0
      %325 = vmatprep.subr.mxu0 0.0
      %326 = vmatpush1.msra.mxu0 0.0
      %327 = vmatprep.subr.mxu0 0.0
      %328 = vmatpush1.msra.mxu0 0.0
      %329 = vmatprep.subr.mxu0 0.0
      %330 = vmatpush1.msra.mxu0 0.0
      %331 = vmatprep.subr.mxu0 0.0
      %332 = vmatpush1.msra.mxu0 0.0
      %333 = vmatprep.subr.mxu0 0.0
      %334 = vmatpush1.msra.mxu0 0.0
      %335 = vmatprep.subr.mxu0 0.0
      %336 = vmatpush1.msra.mxu0 0.0
      %337 = vmatprep.subr.mxu0 0.0
      %338 = vmatpush1.msra.mxu0 0.0
      %339 = vmatprep.subr.mxu0 0.0
      %340 = vmatpush1.msra.mxu0 0.0
      %341 = vmatprep.subr.mxu0 0.0
      %342 = vmatpush1.msra.mxu0 0.0
      %343 = vmatprep.subr.mxu0 0.0
      %344 = vmatpush1.msra.mxu0 0.0
      %345 = vmatprep.subr.mxu0 0.0
      %346 = vmatpush1.msra.mxu0 0.0
      %347 = vmatprep.subr.mxu0 0.0
      %348 = vmatpush1.msra.mxu0 0.0
      %349 = vmatprep.subr.mxu0 0.0
      %350 = vmatpush1.msra.mxu0 0.0
      %351 = vmatprep.subr.mxu0 0.0
      %352 = vmatpush1.msra.mxu0 0.0
      %353 = vmatprep.subr.mxu0 0.0
      %354 = vmatpush1.msra.mxu0 0.0
      %355 = vmatprep.subr.mxu0 0.0
      %356 = vmatpush1.msra.mxu0 0.0
      %357 = vmatprep.subr.mxu0 0.0
      %358 = vmatpush1.msra.mxu0 0.0
      %359 = vmatprep.subr.mxu0 0.0
      %360 = vmatpush1.msra.mxu0 0.0
      %361 = vmatprep.subr.mxu0 0.0
      %362 = vmatpush1.msra.mxu0 0.0
      %363 = vmatprep.subr.mxu0 0.0
      %364 = vmatpush1.msra.mxu0 0.0
      %365 = vmatprep.mubr.f32.mxu0 0.0
      %366 = vmatmul.mubr.f32.gmra.mrb[0].mxu0 %v194
      %v367 = vpop.f32.mrb[0].mxu0
      %v368 = vadd.f32 0.0, %v367
      %v369 = vpop.f32.mrb[0].mxu0
      %v370 = vadd.f32 0.0, %v369
      %371 = vdwg.mxu0
      %v372 = vmax.f32 %v270, %v368
      %v373 = vmax.f32 %v272, %v370
      %s374 = scalar_lea.vmem %s165, 320
      %v375 = vld [vmem:[%s374] sm:$0xff]
      %v376 = vld [vmem:[%s374 + $0x8] sm:$0xff]
      %v377 = vld [vmem:[%s374 + $0x10] sm:$0xff]
      %v378 = vld [vmem:[%s374 + $0x18] sm:$0xff]
      %v379 = vld [vmem:[%s374 + $0x20] sm:$0xff]
      %v380 = vld [vmem:[%s374 + $0x28] sm:$0xff]
      %v381 = vld [vmem:[%s374 + $0x30] sm:$0xff]
      %v382 = vld [vmem:[%s374 + $0x38] sm:$0xff]
      %v383 = vld [vmem:[%s374 + $0x40] sm:$0xff]
      %v384 = vld [vmem:[%s374 + $0x48] sm:$0xff]
      %v385 = vld [vmem:[%s374 + $0x50] sm:$0xff]
      %v386 = vld [vmem:[%s374 + $0x58] sm:$0xff]
      %v387 = vld [vmem:[%s374 + $0x60] sm:$0xff]
      %v388 = vld [vmem:[%s374 + $0x68] sm:$0xff]
      %v389 = vld [vmem:[%s374 + $0x70] sm:$0xff]
      %v390 = vld [vmem:[%s374 + $0x78] sm:$0xff]
      %v391 = vld [vmem:[%s374 + $0x80] sm:$0xff]
      %v392 = vld [vmem:[%s374 + $0x88] sm:$0xff]
      %v393 = vld [vmem:[%s374 + $0x90] sm:$0x7]
      %v394 = vld [vmem:[%s374 + $0x98] sm:$0x7]
      %v396 = vsel %vm196, %v393, 0
      %v399 = vsel %vm196, %v394, 0
      %401 = vmatprep.subr.mxu0 %v376
      %402 = vmatpush1.msra.mxu0 %v375
      %403 = vmatprep.subr.mxu0 %v378
      %404 = vmatpush1.msra.mxu0 %v377
      %405 = vmatprep.subr.mxu0 %v380
      %406 = vmatpush1.msra.mxu0 %v379
      %407 = vmatprep.subr.mxu0 %v382
      %408 = vmatpush1.msra.mxu0 %v381
      %409 = vmatprep.subr.mxu0 %v384
      %410 = vmatpush1.msra.mxu0 %v383
      %411 = vmatprep.subr.mxu0 %v386
      %412 = vmatpush1.msra.mxu0 %v385
      %413 = vmatprep.subr.mxu0 %v388
      %414 = vmatpush1.msra.mxu0 %v387
      %415 = vmatprep.subr.mxu0 %v390
      %416 = vmatpush1.msra.mxu0 %v389
      %417 = vmatprep.subr.mxu0 %v392
      %418 = vmatpush1.msra.mxu0 %v391
      %419 = vmatprep.subr.mxu0 %v399
      %420 = vmatpush1.msra.mxu0 %v396
      %421 = vmatprep.subr.mxu0 0.0
      %422 = vmatpush1.msra.mxu0 0.0
      %423 = vmatprep.subr.mxu0 0.0
      %424 = vmatpush1.msra.mxu0 0.0
      %425 = vmatprep.subr.mxu0 0.0
      %426 = vmatpush1.msra.mxu0 0.0
      %427 = vmatprep.subr.mxu0 0.0
      %428 = vmatpush1.msra.mxu0 0.0
      %429 = vmatprep.subr.mxu0 0.0
      %430 = vmatpush1.msra.mxu0 0.0
      %431 = vmatprep.subr.mxu0 0.0
      %432 = vmatpush1.msra.mxu0 0.0
      %433 = vmatprep.subr.mxu0 0.0
      %434 = vmatpush1.msra.mxu0 0.0
      %435 = vmatprep.subr.mxu0 0.0
      %436 = vmatpush1.msra.mxu0 0.0
      %437 = vmatprep.subr.mxu0 0.0
      %438 = vmatpush1.msra.mxu0 0.0
      %439 = vmatprep.subr.mxu0 0.0
      %440 = vmatpush1.msra.mxu0 0.0
      %441 = vmatprep.subr.mxu0 0.0
      %442 = vmatpush1.msra.mxu0 0.0
      %443 = vmatprep.subr.mxu0 0.0
      %444 = vmatpush1.msra.mxu0 0.0
      %445 = vmatprep.subr.mxu0 0.0
      %446 = vmatpush1.msra.mxu0 0.0
      %447 = vmatprep.subr.mxu0 0.0
      %448 = vmatpush1.msra.mxu0 0.0
      %449 = vmatprep.subr.mxu0 0.0
      %450 = vmatpush1.msra.mxu0 0.0
      %451 = vmatprep.subr.mxu0 0.0
      %452 = vmatpush1.msra.mxu0 0.0
      %453 = vmatprep.subr.mxu0 0.0
      %454 = vmatpush1.msra.mxu0 0.0
      %455 = vmatprep.subr.mxu0 0.0
      %456 = vmatpush1.msra.mxu0 0.0
      %457 = vmatprep.subr.mxu0 0.0
      %458 = vmatpush1.msra.mxu0 0.0
      %459 = vmatprep.subr.mxu0 0.0
      %460 = vmatpush1.msra.mxu0 0.0
      %461 = vmatprep.subr.mxu0 0.0
      %462 = vmatpush1.msra.mxu0 0.0
      %463 = vmatprep.subr.mxu0 0.0
      %464 = vmatpush1.msra.mxu0 0.0
      %465 = vmatprep.mubr.f32.mxu0 0.0
      %466 = vmatmul.mubr.f32.gmra.mrb[0].mxu0 %v194
      %v467 = vpop.f32.mrb[0].mxu0
      %v468 = vadd.f32 0.0, %v467
      %v469 = vpop.f32.mrb[0].mxu0
      %v470 = vadd.f32 0.0, %v469
      %471 = vdwg.mxu0
      %v472 = vmax.f32 %v372, %v468
      %v473 = vmax.f32 %v373, %v470
      %s474 = scalar_lea.vmem %s165, 480
      %v475 = vld [vmem:[%s474] sm:$0xff]
      %v476 = vld [vmem:[%s474 + $0x8] sm:$0xff]
      %v477 = vld [vmem:[%s474 + $0x10] sm:$0xff]
      %v478 = vld [vmem:[%s474 + $0x18] sm:$0xff]
      %v479 = vld [vmem:[%s474 + $0x20] sm:$0xff]
      %v480 = vld [vmem:[%s474 + $0x28] sm:$0xff]
      %v481 = vld [vmem:[%s474 + $0x30] sm:$0xff]
      %v482 = vld [vmem:[%s474 + $0x38] sm:$0xff]
      %v483 = vld [vmem:[%s474 + $0x40] sm:$0xff]
      %v484 = vld [vmem:[%s474 + $0x48] sm:$0xff]
      %v485 = vld [vmem:[%s474 + $0x50] sm:$0xff]
      %v486 = vld [vmem:[%s474 + $0x58] sm:$0xff]
      %v487 = vld [vmem:[%s474 + $0x60] sm:$0xff]
      %v488 = vld [vmem:[%s474 + $0x68] sm:$0xff]
      %v489 = vld [vmem:[%s474 + $0x70] sm:$0xff]
      %v490 = vld [vmem:[%s474 + $0x78] sm:$0xff]
      %v491 = vld [vmem:[%s474 + $0x80] sm:$0xff]
      %v492 = vld [vmem:[%s474 + $0x88] sm:$0xff]
      %v493 = vld [vmem:[%s474 + $0x90] sm:$0x7]
      %v494 = vld [vmem:[%s474 + $0x98] sm:$0x7]
      %v496 = vsel %vm196, %v493, 0
      %v499 = vsel %vm196, %v494, 0
      %501 = vmatprep.subr.mxu0 %v476
      %502 = vmatpush1.msra.mxu0 %v475
      %503 = vmatprep.subr.mxu0 %v478
      %504 = vmatpush1.msra.mxu0 %v477
      %505 = vmatprep.subr.mxu0 %v480
      %506 = vmatpush1.msra.mxu0 %v479
      %507 = vmatprep.subr.mxu0 %v482
      %508 = vmatpush1.msra.mxu0 %v481
      %509 = vmatprep.subr.mxu0 %v484
      %510 = vmatpush1.msra.mxu0 %v483
      %511 = vmatprep.subr.mxu0 %v486
      %512 = vmatpush1.msra.mxu0 %v485
      %513 = vmatprep.subr.mxu0 %v488
      %514 = vmatpush1.msra.mxu0 %v487
      %515 = vmatprep.subr.mxu0 %v490
      %516 = vmatpush1.msra.mxu0 %v489
      %517 = vmatprep.subr.mxu0 %v492
      %518 = vmatpush1.msra.mxu0 %v491
      %519 = vmatprep.subr.mxu0 %v499
      %520 = vmatpush1.msra.mxu0 %v496
      %521 = vmatprep.subr.mxu0 0.0
      %522 = vmatpush1.msra.mxu0 0.0
      %523 = vmatprep.subr.mxu0 0.0
      %524 = vmatpush1.msra.mxu0 0.0
      %525 = vmatprep.subr.mxu0 0.0
      %526 = vmatpush1.msra.mxu0 0.0
      %527 = vmatprep.subr.mxu0 0.0
      %528 = vmatpush1.msra.mxu0 0.0
      %529 = vmatprep.subr.mxu0 0.0
      %530 = vmatpush1.msra.mxu0 0.0
      %531 = vmatprep.subr.mxu0 0.0
      %532 = vmatpush1.msra.mxu0 0.0
      %533 = vmatprep.subr.mxu0 0.0
      %534 = vmatpush1.msra.mxu0 0.0
      %535 = vmatprep.subr.mxu0 0.0
      %536 = vmatpush1.msra.mxu0 0.0
      %537 = vmatprep.subr.mxu0 0.0
      %538 = vmatpush1.msra.mxu0 0.0
      %539 = vmatprep.subr.mxu0 0.0
      %540 = vmatpush1.msra.mxu0 0.0
      %541 = vmatprep.subr.mxu0 0.0
      %542 = vmatpush1.msra.mxu0 0.0
      %543 = vmatprep.subr.mxu0 0.0
      %544 = vmatpush1.msra.mxu0 0.0
      %545 = vmatprep.subr.mxu0 0.0
      %546 = vmatpush1.msra.mxu0 0.0
      %547 = vmatprep.subr.mxu0 0.0
      %548 = vmatpush1.msra.mxu0 0.0
      %549 = vmatprep.subr.mxu0 0.0
      %550 = vmatpush1.msra.mxu0 0.0
      %551 = vmatprep.subr.mxu0 0.0
      %552 = vmatpush1.msra.mxu0 0.0
      %553 = vmatprep.subr.mxu0 0.0
      %554 = vmatpush1.msra.mxu0 0.0
      %555 = vmatprep.subr.mxu0 0.0
      %556 = vmatpush1.msra.mxu0 0.0
      %557 = vmatprep.subr.mxu0 0.0
      %558 = vmatpush1.msra.mxu0 0.0
      %559 = vmatprep.subr.mxu0 0.0
      %560 = vmatpush1.msra.mxu0 0.0
      %561 = vmatprep.subr.mxu0 0.0
      %562 = vmatpush1.msra.mxu0 0.0
      %563 = vmatprep.subr.mxu0 0.0
      %564 = vmatpush1.msra.mxu0 0.0
      %565 = vmatprep.mubr.f32.mxu0 0.0
      %566 = vmatmul.mubr.f32.gmra.mrb[0].mxu0 %v194
      %v567 = vpop.f32.mrb[0].mxu0
      %v568 = vadd.f32 0.0, %v567
      %v569 = vpop.f32.mrb[0].mxu0
      %v570 = vadd.f32 0.0, %v569
      %571 = vdwg.mxu0
      %v572 = vmax.f32 %v472, %v568
      %v573 = vmax.f32 %v473, %v570
      %v574 = vld [vmem:[%s2] sm:$0x3f]
      %576 = vset.pattern.permute.xlu0 0
      %577 = vperm.xlu0 %576, %v574
      %v578 = vpop.permute.xlu0 %577
      %v580 = vadd.f32 %v572, %v578
      %v581 = vadd.f32 %v573, %v578
      %v582 = vmax.f32 %v580, 0.0
      %v583 = vmax.f32 %v581, 0.0
      %584 = vst [vmem:[%s170] sm:$0x3f] %v582
      %vm585 = vcmask 553984
      %586 = vst.msk [vmem:[%s170 + $0x8] sm:$0x3f] %vm585, %v583
      %p587 = scmp.lt.s32.totalorder %s14, 1
      %s588 = scalar_select %p587, %s14, 1
      %s589 = smul.addr %s588, 2
      %s590 = smul.addr %s589, 8
      %s591 = scalar_lea.vmem %s3, %s590
      // Predicated region
      $region33: #{_net_forward.3} parent=31 // pred_check
        %p592 = pneg %p100
      $region34: #{_net_forward.3} parent=31 // pred_check_branch
        %594 = sbr.rel (%p592) target = $region36
      $region35: #{_net_forward.3} parent=31 // pred_region
        _
      $region36: #{_net_forward.3} parent=31 // pred_fallthru
        _
    $region32: #{_net_forward.3} parent=5 // pred_fallthru
      _
    %p595 = scmp.le.s32.totalorder 2, %s9
    // Predicated region
    $region37: #{_net_forward.3} parent=5 // pred_check
      %p596 = pneg %p595
    $region38: #{_net_forward.3} parent=5 // pred_check_branch
      %598 = sbr.rel (%p596) target = $region40
    $region39: #{_net_forward.3} parent=5 // pred_region
      %s599 = ssub.s32 %s9, 2
      // Predicated region
      $region41: #{_net_forward.3} parent=39 // pred_check
        %p600 = pneg %p106
      $region42: #{_net_forward.3} parent=39 // pred_check_branch
        %602 = sbr.rel (%p600) target = $region44
      $region43: #{_net_forward.3} parent=39 // pred_region
        %p603 = scmp.lt.s32.totalorder %s15, 1
        %s604 = scalar_select %p603, %s15, 1
        %s605 = smul.addr %s604, 2
        %s606 = smul.addr %s605, 8
        %s607 = scalar_lea.vmem %s3, %s606
      $region44: #{_net_forward.3} parent=39 // pred_fallthru
        _
    $region40: #{_net_forward.3} parent=5 // pred_fallthru
      _
  $region6: #{_net_forward.3} parent=0 // loop_footer
    %s13 = sadd.s32 1, %s9
  $region7: #{_net_forward.3} parent=0 // loop_footer_branch
    %8 = sbr.rel target = $region3
  $region8: #{_net_forward.3} parent=0 // loop_exit
    _

// kernel: _net_forward.4
$region0: #{_net_forward.4}
  #allocation0 [shape = 'u32[]', space=smem, size = 0x4, offset = 0x4, fixed_abs, tag = 'smem constant byte address 0x4 - core index']
  #allocation1 [shape = 'u32[144,128]{1,0:T(1,128)}', space=vmem, size = 0x12000, scoped, tag = 'internal scratch']
  %s0 = inlined_call_operand.vmem [shape: f32[2,4,150,25], index: 0, kind: input, shape index: {}]
  %s1 = inlined_call_operand.vmem [shape: f32[16,150], index: 1, kind: input, shape index: {}]
  %s2 = inlined_call_operand.vmem [shape: f32[16,1], index: 2, kind: input, shape index: {}]
  %s3 = inlined_call_operand.vmem [shape: f32[2,16,25], index: 3, kind: output, shape index: {}]
  %s4 = sld [smem:[#allocation0]]
  $region45: #{_net_forward.4} parent=0
    _
  %s6 = ssub.s32 1, %s4
  %s7 = scalar_select 0, %s6, %s4
  loop: start=0, step=1, limit=4
  $region2: #{_net_forward.4} parent=0 // loop_pre_header
    _
  $region3: #{_net_forward.4} parent=0 // loop_header
    %s9 = sphi 0, %s13
    %p10 = scmp.ge.s32.totalorder %s9, 4
    %s19 = sphi 0, %s21
    %s22 = sphi 0, %s19
    %s23 = sphi 0, %s22
    %s39 = sphi 0, %s23
    %s43 = sphi 0, %s43
    %s45 = sphi 0, %s43
    %s46 = sphi 0, %s45
    %s60 = sphi 0, %s46
    %s64 = sphi 0, %s64
    %s66 = sphi 0, %s64
    %s67 = sphi 0, %s66
    %s81 = sphi 0, %s67
    %s87 = sphi 0, %s89
    %s90 = sphi 0, %s87
    %s91 = sphi 0, %s90
    %s107 = sphi 0, %s91
  $region4: #{_net_forward.4} parent=0 // loop_header_branch
    %12 = sbr.rel (%p10) target = $region8
  $region5: #{_net_forward.4} parent=0 // loop_body
    %s14 = ssub.s32 %s9, 1
    %s15 = ssub.s32 %s9, 2
    %s16 = sadd.s32 %s9, 1
    %s17 = ssub.s32 %s9, %s16
    %p18 = scmp.eq.s32.totalorder %s17, 0
    %s20 = sadd.s32 %s19, 1
    %s21 = scalar_select %p18, %s19, %s20
    %p24 = pneg %p18
    %p25 = scmp.eq.s32.totalorder %s9, 1
    %p26 = por %p24, %p25
    %p27 = scmp.ne.s32.totalorder %s19, %s22
    %p28 = scmp.eq.s32.totalorder %s9, 0
    %p29 = por %p27, %p28
    %p30 = scmp.ne.s32.totalorder %s19, %s22
    %p31 = scmp.eq.s32.totalorder %s14, 1
    %p32 = por %p30, %p31
    %p33 = scmp.ne.s32.totalorder %s22, %s23
    %p34 = scmp.eq.s32.totalorder %s14, 0
    %p35 = por %p33, %p34
    %p36 = scmp.ne.s32.totalorder %s22, %s23
    %p37 = scmp.eq.s32.totalorder %s15, 1
    %p38 = por %p36, %p37
    %p40 = scmp.ne.s32.totalorder %s23, %s39
    %p41 = scmp.eq.s32.totalorder %s15, 0
    %p42 = por %p40, %p41
    %s44 = sadd.s32 %s43, 1
    %p47 = scmp.eq.s32.totalorder %s9, 1
    %p48 = scmp.ne.s32.totalorder %s43, %s45
    %p49 = scmp.eq.s32.totalorder %s9, 0
    %p50 = por %p48, %p49
    %p51 = scmp.ne.s32.totalorder %s43, %s45
    %p52 = scmp.eq.s32.totalorder %s14, 1
    %p53 = por %p51, %p52
    %p54 = scmp.ne.s32.totalorder %s45, %s46
    %p55 = scmp.eq.s32.totalorder %s14, 0
    %p56 = por %p54, %p55
    %p57 = scmp.ne.s32.totalorder %s45, %s46
    %p58 = scmp.eq.s32.totalorder %s15, 1
    %p59 = por %p57, %p58
    %p61 = scmp.ne.s32.totalorder %s46, %s60
    %p62 = scmp.eq.s32.totalorder %s15, 0
    %p63 = por %p61, %p62
    %s65 = sadd.s32 %s64, 1
    %p68 = scmp.eq.s32.totalorder %s9, 1
    %p69 = scmp.ne.s32.totalorder %s64, %s66
    %p70 = scmp.eq.s32.totalorder %s9, 0
    %p71 = por %p69, %p70
    %p72 = scmp.ne.s32.totalorder %s64, %s66
    %p73 = scmp.eq.s32.totalorder %s14, 1
    %p74 = por %p72, %p73
    %p75 = scmp.ne.s32.totalorder %s66, %s67
    %p76 = scmp.eq.s32.totalorder %s14, 0
    %p77 = por %p75, %p76
    %p78 = scmp.ne.s32.totalorder %s66, %s67
    %p79 = scmp.eq.s32.totalorder %s15, 1
    %p80 = por %p78, %p79
    %p82 = scmp.ne.s32.totalorder %s67, %s81
    %p83 = scmp.eq.s32.totalorder %s15, 0
    %p84 = por %p82, %p83
    %s85 = ssub.s32 %s9, %s16
    %p86 = scmp.eq.s32.totalorder %s85, 0
    %s88 = sadd.s32 %s87, 1
    %s89 = scalar_select %p86, %s87, %s88
    %p92 = pneg %p86
    %p93 = scmp.eq.s32.totalorder %s9, 1
    %p94 = por %p92, %p93
    %p95 = scmp.ne.s32.totalorder %s87, %s90
    %p96 = scmp.eq.s32.totalorder %s9, 0
    %p97 = por %p95, %p96
    %p98 = scmp.ne.s32.totalorder %s87, %s90
    %p99 = scmp.eq.s32.totalorder %s14, 1
    %p100 = por %p98, %p99
    %p101 = scmp.ne.s32.totalorder %s90, %s91
    %p102 = scmp.eq.s32.totalorder %s14, 0
    %p103 = por %p101, %p102
    %p104 = scmp.ne.s32.totalorder %s90, %s91
    %p105 = scmp.eq.s32.totalorder %s15, 1
    %p106 = por %p104, %p105
    %p108 = scmp.ne.s32.totalorder %s91, %s107
    %p109 = scmp.eq.s32.totalorder %s15, 0
    %p110 = por %p108, %p109
    %p111 = scmp.le.s32.totalorder 1, %s9
    %p112 = scmp.lt.s32.totalorder %s9, 3
    %p113 = pnand %p111, %p112
    %p114 = pneg %p113
    // Predicated region
    $region9: #{_net_forward.4} parent=5 // pred_check
      _
    $region10: #{_net_forward.4} parent=5 // pred_check_branch
      %116 = sbr.rel (%p113) target = $region12
    $region11: #{_net_forward.4} parent=5 // pred_region
      %s117 = ssub.s32 %s9, 1
      // Predicated region
      $region13: #{_net_forward.4} parent=11 // pred_check
        %p118 = pneg %p56
      $region14: #{_net_forward.4} parent=11 // pred_check_branch
        %120 = sbr.rel (%p118) target = $region16
      $region15: #{_net_forward.4} parent=11 // pred_region
        _
      $region16: #{_net_forward.4} parent=11 // pred_fallthru
        _
      // Predicated region
      $region17: #{_net_forward.4} parent=11 // pred_check
        %p121 = pneg %p77
      $region18: #{_net_forward.4} parent=11 // pred_check_branch
        %123 = sbr.rel (%p121) target = $region20
      $region19: #{_net_forward.4} parent=11 // pred_region
        _
      $region20: #{_net_forward.4} parent=11 // pred_fallthru
        _
    $region12: #{_net_forward.4} parent=5 // pred_fallthru
      _
    %p124 = scmp.lt.s32.totalorder %s9, 2
    // Predicated region
    $region21: #{_net_forward.4} parent=5 // pred_check
      %p125 = pneg %p124
    $region22: #{_net_forward.4} parent=5 // pred_check_branch
      %127 = sbr.rel (%p125) target = $region24
    $region23: #{_net_forward.4} parent=5 // pred_region
      // Predicated region
      $region25: #{_net_forward.4} parent=23 // pred_check
        %p128 = pneg %p29
      $region26: #{_net_forward.4} parent=23 // pred_check_branch
        %130 = sbr.rel (%p128) target = $region28
      $region27: #{_net_forward.4} parent=23 // pred_region
        %p131 = scmp.lt.s32.totalorder %s9, 1
        %s132 = scalar_select %p131, %s9, 1
        %s133 = smul.addr %s132, 76
        %s134 = smul.addr %s133, 8
        %s135 = scalar_lea.vmem %s0, %s134
      $region28: #{_net_forward.4} parent=23 // pred_fallthru
        _
    $region24: #{_net_forward.4} parent=5 // pred_fallthru
      _
    %p136 = scmp.le.s32.totalorder 1, %s9
    %p137 = scmp.lt.s32.totalorder %s9, 3
    %p138 = pnand %p136, %p137
    %p139 = pneg %p138
    // Predicated region
    $region29: #{_net_forward.4} parent=5 // pred_check
      _
    $region30: #{_net_forward.4} parent=5 // pred_check_branch
      %141 = sbr.rel (%p138) target = $region32
    $region31: #{_net_forward.4} parent=5 // pred_region
      %s142 = ssub.s32 %s9, 1
      %p143 = scmp.lt.s32.totalorder %s14, 1
      %s144 = scalar_select %p143, %s14, 1
      %s145 = smul.addr %s144, 76
      %s146 = smul.addr %s145, 8
      %s147 = scalar_lea.vmem %s0, %s146
      %p148 = pneg %p35
      %p149 = pneg %p32
      %p150 = pneg %p56
      %p151 = pneg %p53
      %p152 = pneg %p77
      %p153 = pneg %p74
      %p154 = pneg %p103
      %p155 = pneg %p100
      %p156 = scmp.lt.s32.totalorder %s14, 1
      %s157 = scalar_select %p156, %s14, 1
      %s158 = smul.addr %s157, 2
      %s159 = smul.addr %s158, 8
      %s160 = scalar_lea.vmem %s3, %s159
      %p161 = scmp.lt.s32.totalorder %s14, 1
      %s162 = scalar_select %p161, %s14, 1
      %s163 = smul.addr %s162, 76
      %s164 = smul.addr %s163, 8
      %s165 = scalar_lea.vmem %s0, %s164
      %p166 = scmp.lt.s32.totalorder %s14, 1
      %s167 = scalar_select %p166, %s14, 1
      %s168 = smul.addr %s167, 2
      %s169 = smul.addr %s168, 8
      %s170 = scalar_lea.vmem %s3, %s169
      %v171 = vld [vmem:[%s1] sm:$0xff]
      %v172 = vld [vmem:[%s1 + $0x8] sm:$0xff]
      %v173 = vld [vmem:[%s1 + $0x10] sm:$0xff]
      %v174 = vld [vmem:[%s1 + $0x18] sm:$0xff]
      %v175 = vld [vmem:[%s165] sm:$0xff]
      %v176 = vld [vmem:[%s165 + $0x8] sm:$0xff]
      %v177 = vld [vmem:[%s165 + $0x10] sm:$0xff]
      %v178 = vld [vmem:[%s165 + $0x18] sm:$0xff]
      %v179 = vld [vmem:[%s165 + $0x20] sm:$0xff]
      %v180 = vld [vmem:[%s165 + $0x28] sm:$0xff]
      %v181 = vld [vmem:[%s165 + $0x30] sm:$0xff]
      %v182 = vld [vmem:[%s165 + $0x38] sm:$0xff]
      %v183 = vld [vmem:[%s165 + $0x40] sm:$0xff]
      %v184 = vld [vmem:[%s165 + $0x48] sm:$0xff]
      %v185 = vld [vmem:[%s165 + $0x50] sm:$0xff]
      %v186 = vld [vmem:[%s165 + $0x58] sm:$0xff]
      %v187 = vld [vmem:[%s165 + $0x60] sm:$0xff]
      %v188 = vld [vmem:[%s165 + $0x68] sm:$0xff]
      %v189 = vld [vmem:[%s165 + $0x70] sm:$0xff]
      %v190 = vld [vmem:[%s165 + $0x78] sm:$0xff]
      %v191 = vld [vmem:[%s165 + $0x80] sm:$0xff]
      %v192 = vld [vmem:[%s165 + $0x88] sm:$0xff]
      %v193 = vld [vmem:[%s165 + $0x90] sm:$0x3f]
      %vm194 = vcmask 179200
      %v196 = vsel %vm194, %v172, 0
      %v199 = vsel %vm194, %v174, 0
      %vm201 = vcmask 1045504
      %v203 = vsel %vm201, %v193, 0
      %205 = vmatprep.subr.mxu0 0.0
      %206 = vmatpush1.msra.mxu0 %v175
      %207 = vmatprep.subr.mxu0 0.0
      %208 = vmatpush1.msra.mxu0 %v176
      %209 = vmatprep.subr.mxu0 0.0
      %210 = vmatpush1.msra.mxu0 %v177
      %211 = vmatprep.subr.mxu0 0.0
      %212 = vmatpush1.msra.mxu0 %v178
      %213 = vmatprep.subr.mxu0 0.0
      %214 = vmatpush1.msra.mxu0 %v179
      %215 = vmatprep.subr.mxu0 0.0
      %216 = vmatpush1.msra.mxu0 %v180
      %217 = vmatprep.subr.mxu0 0.0
      %218 = vmatpush1.msra.mxu0 %v181
      %219 = vmatprep.subr.mxu0 0.0
      %220 = vmatpush1.msra.mxu0 %v182
      %221 = vmatprep.subr.mxu0 0.0
      %222 = vmatpush1.msra.mxu0 %v183
      %223 = vmatprep.subr.mxu0 0.0
      %224 = vmatpush1.msra.mxu0 %v184
      %225 = vmatprep.subr.mxu0 0.0
      %226 = vmatpush1.msra.mxu0 %v185
      %227 = vmatprep.subr.mxu0 0.0
      %228 = vmatpush1.msra.mxu0 %v186
      %229 = vmatprep.subr.mxu0 0.0
      %230 = vmatpush1.msra.mxu0 %v187
      %231 = vmatprep.subr.mxu0 0.0
      %232 = vmatpush1.msra.mxu0 %v188
      %233 = vmatprep.subr.mxu0 0.0
      %234 = vmatpush1.msra.mxu0 %v189
      %235 = vmatprep.subr.mxu0 0.0
      %236 = vmatpush1.msra.mxu0 %v190
      %237 = vmatprep.subr.mxu0 0.0
      %238 = vmatpush1.msra.mxu0 %v191
      %239 = vmatprep.subr.mxu0 0.0
      %240 = vmatpush1.msra.mxu0 %v192
      %241 = vmatprep.subr.mxu0 0.0
      %242 = vmatpush1.msra.mxu0 %v203
      %243 = vmatprep.subr.mxu0 0.0
      %244 = vmatpush1.msra.mxu0 0.0
      %245 = vmatprep.subr.mxu0 0.0
      %246 = vmatpush1.msra.mxu0 0.0
      %247 = vmatprep.subr.mxu0 0.0
      %248 = vmatpush1.msra.mxu0 0.0
      %249 = vmatprep.subr.mxu0 0.0
      %250 = vmatpush1.msra.mxu0 0.0
      %251 = vmatprep.subr.mxu0 0.0
      %252 = vmatpush1.msra.mxu0 0.0
      %253 = vmatprep.subr.mxu0 0.0
      %254 = vmatpush1.msra.mxu0 0.0
      %255 = vmatprep.subr.mxu0 0.0
      %256 = vmatpush1.msra.mxu0 0.0
      %257 = vmatprep.subr.mxu0 0.0
      %258 = vmatpush1.msra.mxu0 0.0
      %259 = vmatprep.subr.mxu0 0.0
      %260 = vmatpush1.msra.mxu0 0.0
      %261 = vmatprep.subr.mxu0 0.0
      %262 = vmatpush1.msra.mxu0 0.0
      %263 = vmatprep.subr.mxu0 0.0
      %264 = vmatpush1.msra.mxu0 0.0
      %265 = vmatprep.subr.mxu0 0.0
      %266 = vmatpush1.msra.mxu0 0.0
      %267 = vmatprep.subr.mxu0 0.0
      %268 = vmatpush1.msra.mxu0 0.0
      %269 = vmatprep.mubr.f32.mxu0 %v196
      %270 = vmatmul.mubr.f32.gmra.mrb[0].mxu0 %v171
      %v271 = vpop.f32.mrb[0].mxu0
      %v272 = vadd.f32 0.0, %v271
      %v273 = vpop.f32.mrb[0].mxu0
      %274 = vmatprep.mubr.f32.mxu0 %v199
      %275 = vmatmul.mubr.f32.gmra.mrb[0].mxu0 %v173
      %v276 = vpop.f32.mrb[0].mxu0
      %v277 = vadd.f32 0.0, %v276
      %v278 = vpop.f32.mrb[0].mxu0
      %279 = vdwg.mxu0
      %s280 = scalar_lea.vmem %s165, 152
      %v281 = vld [vmem:[%s280] sm:$0xff]
      %v282 = vld [vmem:[%s280 + $0x8] sm:$0xff]
      %v283 = vld [vmem:[%s280 + $0x10] sm:$0xff]
      %v284 = vld [vmem:[%s280 + $0x18] sm:$0xff]
      %v285 = vld [vmem:[%s280 + $0x20] sm:$0xff]
      %v286 = vld [vmem:[%s280 + $0x28] sm:$0xff]
      %v287 = vld [vmem:[%s280 + $0x30] sm:$0xff]
      %v288 = vld [vmem:[%s280 + $0x38] sm:$0xff]
      %v289 = vld [vmem:[%s280 + $0x40] sm:$0xff]
      %v290 = vld [vmem:[%s280 + $0x48] sm:$0xff]
      %v291 = vld [vmem:[%s280 + $0x50] sm:$0xff]
      %v292 = vld [vmem:[%s280 + $0x58] sm:$0xff]
      %v293 = vld [vmem:[%s280 + $0x60] sm:$0xff]
      %v294 = vld [vmem:[%s280 + $0x68] sm:$0xff]
      %v295 = vld [vmem:[%s280 + $0x70] sm:$0xff]
      %v296 = vld [vmem:[%s280 + $0x78] sm:$0xff]
      %v297 = vld [vmem:[%s280 + $0x80] sm:$0xff]
      %v298 = vld [vmem:[%s280 + $0x88] sm:$0xff]
      %v299 = vld [vmem:[%s280 + $0x90] sm:$0x3f]
      %v301 = vsel %vm201, %v299, 0
      %303 = vmatprep.subr.mxu0 0.0
      %304 = vmatpush1.msra.mxu0 %v281
      %305 = vmatprep.subr.mxu0 0.0
      %306 = vmatpush1.msra.mxu0 %v282
      %307 = vmatprep.subr.mxu0 0.0
      %308 = vmatpush1.msra.mxu0 %v283
      %309 = vmatprep.subr.mxu0 0.0
      %310 = vmatpush1.msra.mxu0 %v284
      %311 = vmatprep.subr.mxu0 0.0
      %312 = vmatpush1.msra.mxu0 %v285
      %313 = vmatprep.subr.mxu0 0.0
      %314 = vmatpush1.msra.mxu0 %v286
      %315 = vmatprep.subr.mxu0 0.0
      %316 = vmatpush1.msra.mxu0 %v287
      %317 = vmatprep.subr.mxu0 0.0
      %318 = vmatpush1.msra.mxu0 %v288
      %319 = vmatprep.subr.mxu0 0.0
      %320 = vmatpush1.msra.mxu0 %v289
      %321 = vmatprep.subr.mxu0 0.0
      %322 = vmatpush1.msra.mxu0 %v290
      %323 = vmatprep.subr.mxu0 0.0
      %324 = vmatpush1.msra.mxu0 %v291
      %325 = vmatprep.subr.mxu0 0.0
      %326 = vmatpush1.msra.mxu0 %v292
      %327 = vmatprep.subr.mxu0 0.0
      %328 = vmatpush1.msra.mxu0 %v293
      %329 = vmatprep.subr.mxu0 0.0
      %330 = vmatpush1.msra.mxu0 %v294
      %331 = vmatprep.subr.mxu0 0.0
      %332 = vmatpush1.msra.mxu0 %v295
      %333 = vmatprep.subr.mxu0 0.0
      %334 = vmatpush1.msra.mxu0 %v296
      %335 = vmatprep.subr.mxu0 0.0
      %336 = vmatpush1.msra.mxu0 %v297
      %337 = vmatprep.subr.mxu0 0.0
      %338 = vmatpush1.msra.mxu0 %v298
      %339 = vmatprep.subr.mxu0 0.0
      %340 = vmatpush1.msra.mxu0 %v301
      %341 = vmatprep.subr.mxu0 0.0
      %342 = vmatpush1.msra.mxu0 0.0
      %343 = vmatprep.subr.mxu0 0.0
      %344 = vmatpush1.msra.mxu0 0.0
      %345 = vmatprep.subr.mxu0 0.0
      %346 = vmatpush1.msra.mxu0 0.0
      %347 = vmatprep.subr.mxu0 0.0
      %348 = vmatpush1.msra.mxu0 0.0
      %349 = vmatprep.subr.mxu0 0.0
      %350 = vmatpush1.msra.mxu0 0.0
      %351 = vmatprep.subr.mxu0 0.0
      %352 = vmatpush1.msra.mxu0 0.0
      %353 = vmatprep.subr.mxu0 0.0
      %354 = vmatpush1.msra.mxu0 0.0
      %355 = vmatprep.subr.mxu0 0.0
      %356 = vmatpush1.msra.mxu0 0.0
      %357 = vmatprep.subr.mxu0 0.0
      %358 = vmatpush1.msra.mxu0 0.0
      %359 = vmatprep.subr.mxu0 0.0
      %360 = vmatpush1.msra.mxu0 0.0
      %361 = vmatprep.subr.mxu0 0.0
      %362 = vmatpush1.msra.mxu0 0.0
      %363 = vmatprep.subr.mxu0 0.0
      %364 = vmatpush1.msra.mxu0 0.0
      %365 = vmatprep.subr.mxu0 0.0
      %366 = vmatpush1.msra.mxu0 0.0
      %367 = vmatprep.mubr.f32.mxu0 %v196
      %368 = vmatmul.mubr.f32.gmra.mrb[0].mxu0 %v171
      %v369 = vpop.f32.mrb[0].mxu0
      %v370 = vadd.f32 0.0, %v369
      %v371 = vpop.f32.mrb[0].mxu0
      %372 = vmatprep.mubr.f32.mxu0 %v199
      %373 = vmatmul.mubr.f32.gmra.mrb[0].mxu0 %v173
      %v374 = vpop.f32.mrb[0].mxu0
      %v375 = vadd.f32 0.0, %v374
      %v376 = vpop.f32.mrb[0].mxu0
      %377 = vdwg.mxu0
      %v378 = vmax.f32 %v272, %v370
      %v379 = vmax.f32 %v277, %v375
      %s380 = scalar_lea.vmem %s165, 304
      %v381 = vld [vmem:[%s380] sm:$0xff]
      %v382 = vld [vmem:[%s380 + $0x8] sm:$0xff]
      %v383 = vld [vmem:[%s380 + $0x10] sm:$0xff]
      %v384 = vld [vmem:[%s380 + $0x18] sm:$0xff]
      %v385 = vld [vmem:[%s380 + $0x20] sm:$0xff]
      %v386 = vld [vmem:[%s380 + $0x28] sm:$0xff]
      %v387 = vld [vmem:[%s380 + $0x30] sm:$0xff]
      %v388 = vld [vmem:[%s380 + $0x38] sm:$0xff]
      %v389 = vld [vmem:[%s380 + $0x40] sm:$0xff]
      %v390 = vld [vmem:[%s380 + $0x48] sm:$0xff]
      %v391 = vld [vmem:[%s380 + $0x50] sm:$0xff]
      %v392 = vld [vmem:[%s380 + $0x58] sm:$0xff]
      %v393 = vld [vmem:[%s380 + $0x60] sm:$0xff]
      %v394 = vld [vmem:[%s380 + $0x68] sm:$0xff]
      %v395 = vld [vmem:[%s380 + $0x70] sm:$0xff]
      %v396 = vld [vmem:[%s380 + $0x78] sm:$0xff]
      %v397 = vld [vmem:[%s380 + $0x80] sm:$0xff]
      %v398 = vld [vmem:[%s380 + $0x88] sm:$0xff]
      %v399 = vld [vmem:[%s380 + $0x90] sm:$0x3f]
      %v401 = vsel %vm201, %v399, 0
      %403 = vmatprep.subr.mxu0 0.0
      %404 = vmatpush1.msra.mxu0 %v381
      %405 = vmatprep.subr.mxu0 0.0
      %406 = vmatpush1.msra.mxu0 %v382
      %407 = vmatprep.subr.mxu0 0.0
      %408 = vmatpush1.msra.mxu0 %v383
      %409 = vmatprep.subr.mxu0 0.0
      %410 = vmatpush1.msra.mxu0 %v384
      %411 = vmatprep.subr.mxu0 0.0
      %412 = vmatpush1.msra.mxu0 %v385
      %413 = vmatprep.subr.mxu0 0.0
      %414 = vmatpush1.msra.mxu0 %v386
      %415 = vmatprep.subr.mxu0 0.0
      %416 = vmatpush1.msra.mxu0 %v387
      %417 = vmatprep.subr.mxu0 0.0
      %418 = vmatpush1.msra.mxu0 %v388
      %419 = vmatprep.subr.mxu0 0.0
      %420 = vmatpush1.msra.mxu0 %v389
      %421 = vmatprep.subr.mxu0 0.0
      %422 = vmatpush1.msra.mxu0 %v390
      %423 = vmatprep.subr.mxu0 0.0
      %424 = vmatpush1.msra.mxu0 %v391
      %425 = vmatprep.subr.mxu0 0.0
      %426 = vmatpush1.msra.mxu0 %v392
      %427 = vmatprep.subr.mxu0 0.0
      %428 = vmatpush1.msra.mxu0 %v393
      %429 = vmatprep.subr.mxu0 0.0
      %430 = vmatpush1.msra.mxu0 %v394
      %431 = vmatprep.subr.mxu0 0.0
      %432 = vmatpush1.msra.mxu0 %v395
      %433 = vmatprep.subr.mxu0 0.0
      %434 = vmatpush1.msra.mxu0 %v396
      %435 = vmatprep.subr.mxu0 0.0
      %436 = vmatpush1.msra.mxu0 %v397
      %437 = vmatprep.subr.mxu0 0.0
      %438 = vmatpush1.msra.mxu0 %v398
      %439 = vmatprep.subr.mxu0 0.0
      %440 = vmatpush1.msra.mxu0 %v401
      %441 = vmatprep.subr.mxu0 0.0
      %442 = vmatpush1.msra.mxu0 0.0
      %443 = vmatprep.subr.mxu0 0.0
      %444 = vmatpush1.msra.mxu0 0.0
      %445 = vmatprep.subr.mxu0 0.0
      %446 = vmatpush1.msra.mxu0 0.0
      %447 = vmatprep.subr.mxu0 0.0
      %448 = vmatpush1.msra.mxu0 0.0
      %449 = vmatprep.subr.mxu0 0.0
      %450 = vmatpush1.msra.mxu0 0.0
      %451 = vmatprep.subr.mxu0 0.0
      %452 = vmatpush1.msra.mxu0 0.0
      %453 = vmatprep.subr.mxu0 0.0
      %454 = vmatpush1.msra.mxu0 0.0
      %455 = vmatprep.subr.mxu0 0.0
      %456 = vmatpush1.msra.mxu0 0.0
      %457 = vmatprep.subr.mxu0 0.0
      %458 = vmatpush1.msra.mxu0 0.0
      %459 = vmatprep.subr.mxu0 0.0
      %460 = vmatpush1.msra.mxu0 0.0
      %461 = vmatprep.subr.mxu0 0.0
      %462 = vmatpush1.msra.mxu0 0.0
      %463 = vmatprep.subr.mxu0 0.0
      %464 = vmatpush1.msra.mxu0 0.0
      %465 = vmatprep.subr.mxu0 0.0
      %466 = vmatpush1.msra.mxu0 0.0
      %467 = vmatprep.mubr.f32.mxu0 %v196
      %468 = vmatmul.mubr.f32.gmra.mrb[0].mxu0 %v171
      %v469 = vpop.f32.mrb[0].mxu0
      %v470 = vadd.f32 0.0, %v469
      %v471 = vpop.f32.mrb[0].mxu0
      %472 = vmatprep.mubr.f32.mxu0 %v199
      %473 = vmatmul.mubr.f32.gmra.mrb[0].mxu0 %v173
      %v474 = vpop.f32.mrb[0].mxu0
      %v475 = vadd.f32 0.0, %v474
      %v476 = vpop.f32.mrb[0].mxu0
      %477 = vdwg.mxu0
      %v478 = vmax.f32 %v378, %v470
      %v479 = vmax.f32 %v379, %v475
      %s480 = scalar_lea.vmem %s165, 456
      %v481 = vld [vmem:[%s480] sm:$0xff]
      %v482 = vld [vmem:[%s480 + $0x8] sm:$0xff]
      %v483 = vld [vmem:[%s480 + $0x10] sm:$0xff]
      %v484 = vld [vmem:[%s480 + $0x18] sm:$0xff]
      %v485 = vld [vmem:[%s480 + $0x20] sm:$0xff]
      %v486 = vld [vmem:[%s480 + $0x28] sm:$0xff]
      %v487 = vld [vmem:[%s480 + $0x30] sm:$0xff]
      %v488 = vld [vmem:[%s480 + $0x38] sm:$0xff]
      %v489 = vld [vmem:[%s480 + $0x40] sm:$0xff]
      %v490 = vld [vmem:[%s480 + $0x48] sm:$0xff]
      %v491 = vld [vmem:[%s480 + $0x50] sm:$0xff]
      %v492 = vld [vmem:[%s480 + $0x58] sm:$0xff]
      %v493 = vld [vmem:[%s480 + $0x60] sm:$0xff]
      %v494 = vld [vmem:[%s480 + $0x68] sm:$0xff]
      %v495 = vld [vmem:[%s480 + $0x70] sm:$0xff]
      %v496 = vld [vmem:[%s480 + $0x78] sm:$0xff]
      %v497 = vld [vmem:[%s480 + $0x80] sm:$0xff]
      %v498 = vld [vmem:[%s480 + $0x88] sm:$0xff]
      %v499 = vld [vmem:[%s480 + $0x90] sm:$0x3f]
      %v501 = vsel %vm201, %v499, 0
      %503 = vmatprep.subr.mxu0 0.0
      %504 = vmatpush1.msra.mxu0 %v481
      %505 = vmatprep.subr.mxu0 0.0
      %506 = vmatpush1.msra.mxu0 %v482
      %507 = vmatprep.subr.mxu0 0.0
      %508 = vmatpush1.msra.mxu0 %v483
      %509 = vmatprep.subr.mxu0 0.0
      %510 = vmatpush1.msra.mxu0 %v484
      %511 = vmatprep.subr.mxu0 0.0
      %512 = vmatpush1.msra.mxu0 %v485
      %513 = vmatprep.subr.mxu0 0.0
      %514 = vmatpush1.msra.mxu0 %v486
      %515 = vmatprep.subr.mxu0 0.0
      %516 = vmatpush1.msra.mxu0 %v487
      %517 = vmatprep.subr.mxu0 0.0
      %518 = vmatpush1.msra.mxu0 %v488
      %519 = vmatprep.subr.mxu0 0.0
      %520 = vmatpush1.msra.mxu0 %v489
      %521 = vmatprep.subr.mxu0 0.0
      %522 = vmatpush1.msra.mxu0 %v490
      %523 = vmatprep.subr.mxu0 0.0
      %524 = vmatpush1.msra.mxu0 %v491
      %525 = vmatprep.subr.mxu0 0.0
      %526 = vmatpush1.msra.mxu0 %v492
      %527 = vmatprep.subr.mxu0 0.0
      %528 = vmatpush1.msra.mxu0 %v493
      %529 = vmatprep.subr.mxu0 0.0
      %530 = vmatpush1.msra.mxu0 %v494
      %531 = vmatprep.subr.mxu0 0.0
      %532 = vmatpush1.msra.mxu0 %v495
      %533 = vmatprep.subr.mxu0 0.0
      %534 = vmatpush1.msra.mxu0 %v496
      %535 = vmatprep.subr.mxu0 0.0
      %536 = vmatpush1.msra.mxu0 %v497
      %537 = vmatprep.subr.mxu0 0.0
      %538 = vmatpush1.msra.mxu0 %v498
      %539 = vmatprep.subr.mxu0 0.0
      %540 = vmatpush1.msra.mxu0 %v501
      %541 = vmatprep.subr.mxu0 0.0
      %542 = vmatpush1.msra.mxu0 0.0
      %543 = vmatprep.subr.mxu0 0.0
      %544 = vmatpush1.msra.mxu0 0.0
      %545 = vmatprep.subr.mxu0 0.0
      %546 = vmatpush1.msra.mxu0 0.0
      %547 = vmatprep.subr.mxu0 0.0
      %548 = vmatpush1.msra.mxu0 0.0
      %549 = vmatprep.subr.mxu0 0.0
      %550 = vmatpush1.msra.mxu0 0.0
      %551 = vmatprep.subr.mxu0 0.0
      %552 = vmatpush1.msra.mxu0 0.0
      %553 = vmatprep.subr.mxu0 0.0
      %554 = vmatpush1.msra.mxu0 0.0
      %555 = vmatprep.subr.mxu0 0.0
      %556 = vmatpush1.msra.mxu0 0.0
      %557 = vmatprep.subr.mxu0 0.0
      %558 = vmatpush1.msra.mxu0 0.0
      %559 = vmatprep.subr.mxu0 0.0
      %560 = vmatpush1.msra.mxu0 0.0
      %561 = vmatprep.subr.mxu0 0.0
      %562 = vmatpush1.msra.mxu0 0.0
      %563 = vmatprep.subr.mxu0 0.0
      %564 = vmatpush1.msra.mxu0 0.0
      %565 = vmatprep.subr.mxu0 0.0
      %566 = vmatpush1.msra.mxu0 0.0
      %567 = vmatprep.mubr.f32.mxu0 %v196
      %568 = vmatmul.mubr.f32.gmra.mrb[0].mxu0 %v171
      %v569 = vpop.f32.mrb[0].mxu0
      %v570 = vadd.f32 0.0, %v569
      %v571 = vpop.f32.mrb[0].mxu0
      %572 = vmatprep.mubr.f32.mxu0 %v199
      %573 = vmatmul.mubr.f32.gmra.mrb[0].mxu0 %v173
      %v574 = vpop.f32.mrb[0].mxu0
      %v575 = vadd.f32 0.0, %v574
      %v576 = vpop.f32.mrb[0].mxu0
      %577 = vdwg.mxu0
      %v578 = vmax.f32 %v478, %v570
      %v579 = vmax.f32 %v479, %v575
      %v580 = vld [vmem:[%s2] sm:$0xff]
      %v581 = vld [vmem:[%s2 + $0x8] sm:$0xff]
      %583 = vset.pattern.permute.xlu0 0
      %584 = vperm.xlu0 %583, %v580
      %v585 = vpop.permute.xlu0 %584
      %588 = vset.pattern.permute.xlu0 0
      %589 = vperm.xlu0 %588, %v581
      %v590 = vpop.permute.xlu0 %589
      %v592 = vadd.f32 %v578, %v585
      %v593 = vadd.f32 %v579, %v590
      %v594 = vmax.f32 %v592, 0.0
      %v595 = vmax.f32 %v593, 0.0
      %vm596 = vcmask 203776
      %597 = vst.msk [vmem:[%s170] sm:$0xff] %vm596, %v594
      %598 = vst.msk [vmem:[%s170 + $0x8] sm:$0xff] %vm596, %v595
      %p599 = scmp.lt.s32.totalorder %s14, 1
      %s600 = scalar_select %p599, %s14, 1
      %s601 = smul.addr %s600, 2
      %s602 = smul.addr %s601, 8
      %s603 = scalar_lea.vmem %s3, %s602
      // Predicated region
      $region33: #{_net_forward.4} parent=31 // pred_check
        %p604 = pneg %p100
      $region34: #{_net_forward.4} parent=31 // pred_check_branch
        %606 = sbr.rel (%p604) target = $region36
      $region35: #{_net_forward.4} parent=31 // pred_region
        _
      $region36: #{_net_forward.4} parent=31 // pred_fallthru
        _
    $region32: #{_net_forward.4} parent=5 // pred_fallthru
      _
    %p607 = scmp.le.s32.totalorder 2, %s9
    // Predicated region
    $region37: #{_net_forward.4} parent=5 // pred_check
      %p608 = pneg %p607
    $region38: #{_net_forward.4} parent=5 // pred_check_branch
      %610 = sbr.rel (%p608) target = $region40
    $region39: #{_net_forward.4} parent=5 // pred_region
      %s611 = ssub.s32 %s9, 2
      // Predicated region
      $region41: #{_net_forward.4} parent=39 // pred_check
        %p612 = pneg %p106
      $region42: #{_net_forward.4} parent=39 // pred_check_branch
        %614 = sbr.rel (%p612) target = $region44
      $region43: #{_net_forward.4} parent=39 // pred_region
        %p615 = scmp.lt.s32.totalorder %s15, 1
        %s616 = scalar_select %p615, %s15, 1
        %s617 = smul.addr %s616, 2
        %s618 = smul.addr %s617, 8
        %s619 = scalar_lea.vmem %s3, %s618
      $region44: #{_net_forward.4} parent=39 // pred_fallthru
        _
    $region40: #{_net_forward.4} parent=5 // pred_fallthru
      _
  $region6: #{_net_forward.4} parent=0 // loop_footer
    %s13 = sadd.s32 1, %s9
  $region7: #{_net_forward.4} parent=0 // loop_footer_branch
    %8 = sbr.rel target = $region3
  $region8: #{_net_forward.4} parent=0 // loop_exit
    _

// kernel: _net_forward.5
$region0: #{_net_forward.5}
  #allocation0 [shape = 'u32[]', space=smem, size = 0x4, offset = 0x4, fixed_abs, tag = 'smem constant byte address 0x4 - core index']
  #allocation1 [shape = 'u32[144,128]{1,0:T(1,128)}', space=vmem, size = 0x12000, scoped, tag = 'internal scratch']
  %s0 = inlined_call_operand.vmem [shape: f32[2,400], index: 0, kind: input, shape index: {}]
  %s1 = inlined_call_operand.vmem [shape: f32[400,120], index: 1, kind: input, shape index: {}]
  %s2 = inlined_call_operand.vmem [shape: f32[1,120], index: 2, kind: input, shape index: {}]
  %s3 = inlined_call_operand.vmem [shape: f32[120,84], index: 3, kind: input, shape index: {}]
  %s4 = inlined_call_operand.vmem [shape: f32[1,84], index: 4, kind: input, shape index: {}]
  %s5 = inlined_call_operand.vmem [shape: f32[84,10], index: 5, kind: input, shape index: {}]
  %s6 = inlined_call_operand.vmem [shape: f32[1,10], index: 6, kind: input, shape index: {}]
  %s7 = inlined_call_operand.hbm [shape: f32[2,10], index: 7, kind: output, shape index: {}]
  %s8 = sld [smem:[#allocation0]]
  $region38: #{_net_forward.5} parent=0
    _
  %s10 = ssub.s32 1, %s8
  %s11 = scalar_select 0, %s10, %s8
  $region1: #{_net_forward.5} parent=0
    #allocation2 [shape = 'u8[1024]{0}', space=vmem, size = 0x400, scoped, tag = 'output window, operand 0, single buffered']
    #allocation3 [shape = 's32[1]{0}', space=sflag, size = 0x4, scoped, tag = 'scoped memory for _net_forward.5']
    %12 = vsyncpa [#allocation3], 0
    // Predicated region
    $region2: #{_net_forward.5} parent=1 // pred_check
      _
    $region3: #{_net_forward.5} parent=1 // pred_check_branch
      %14 = sbr.rel (0) target = $region5
    $region4: #{_net_forward.5} parent=1 // pred_region
      _
    $region5: #{_net_forward.5} parent=1 // pred_fallthru
      _
    // Predicated region
    $region6: #{_net_forward.5} parent=1 // pred_check
      _
    $region7: #{_net_forward.5} parent=1 // pred_check_branch
      %16 = sbr.rel (0) target = $region9
    $region8: #{_net_forward.5} parent=1 // pred_region
      _
    $region9: #{_net_forward.5} parent=1 // pred_fallthru
      _
    // Predicated region
    $region10: #{_net_forward.5} parent=1 // pred_check
      _
    $region11: #{_net_forward.5} parent=1 // pred_check_branch
      %18 = sbr.rel (0) target = $region13
    $region12: #{_net_forward.5} parent=1 // pred_region
      _
    $region13: #{_net_forward.5} parent=1 // pred_fallthru
      _
    // Predicated region
    $region14: #{_net_forward.5} parent=1 // pred_check
      _
    $region15: #{_net_forward.5} parent=1 // pred_check_branch
      %20 = sbr.rel (0) target = $region17
    $region16: #{_net_forward.5} parent=1 // pred_region
      _
    $region17: #{_net_forward.5} parent=1 // pred_fallthru
      _
    // Predicated region
    $region18: #{_net_forward.5} parent=1 // pred_check
      _
    $region19: #{_net_forward.5} parent=1 // pred_check_branch
      %22 = sbr.rel (0) target = $region21
    $region20: #{_net_forward.5} parent=1 // pred_region
      _
    $region21: #{_net_forward.5} parent=1 // pred_fallthru
      _
    // Predicated region
    $region22: #{_net_forward.5} parent=1 // pred_check
      _
    $region23: #{_net_forward.5} parent=1 // pred_check_branch
      %24 = sbr.rel (0) target = $region25
    $region24: #{_net_forward.5} parent=1 // pred_region
      _
    $region25: #{_net_forward.5} parent=1 // pred_fallthru
      _
    // Predicated region
    $region26: #{_net_forward.5} parent=1 // pred_check
      _
    $region27: #{_net_forward.5} parent=1 // pred_check_branch
      %26 = sbr.rel (0) target = $region29
    $region28: #{_net_forward.5} parent=1 // pred_region
      _
    $region29: #{_net_forward.5} parent=1 // pred_fallthru
      _
    %v27 = vld [vmem:[%s0] sm:$0xff]
    %v28 = vld [vmem:[%s1] sm:$0xff]
    %v29 = vld [vmem:[%s1 + $0x8] sm:$0xff]
    %v30 = vld [vmem:[%s1 + $0x10] sm:$0xff]
    %v31 = vld [vmem:[%s1 + $0x18] sm:$0xff]
    %v32 = vld [vmem:[%s1 + $0x20] sm:$0xff]
    %v33 = vld [vmem:[%s1 + $0x28] sm:$0xff]
    %v34 = vld [vmem:[%s1 + $0x30] sm:$0xff]
    %v35 = vld [vmem:[%s1 + $0x38] sm:$0xff]
    %v36 = vld [vmem:[%s1 + $0x40] sm:$0xff]
    %v37 = vld [vmem:[%s1 + $0x48] sm:$0xff]
    %v38 = vld [vmem:[%s1 + $0x50] sm:$0xff]
    %v39 = vld [vmem:[%s1 + $0x58] sm:$0xff]
    %v40 = vld [vmem:[%s1 + $0x60] sm:$0xff]
    %v41 = vld [vmem:[%s1 + $0x68] sm:$0xff]
    %v42 = vld [vmem:[%s1 + $0x70] sm:$0xff]
    %v43 = vld [vmem:[%s1 + $0x78] sm:$0xff]
    %v44 = vld [vmem:[%s1 + $0x80] sm:$0xff]
    %v45 = vld [vmem:[%s1 + $0x88] sm:$0xff]
    %v46 = vld [vmem:[%s1 + $0x90] sm:$0xff]
    %v47 = vld [vmem:[%s1 + $0x98] sm:$0xff]
    %v48 = vld [vmem:[%s1 + $0xa0] sm:$0xff]
    %v49 = vld [vmem:[%s1 + $0xa8] sm:$0xff]
    %v50 = vld [vmem:[%s1 + $0xb0] sm:$0xff]
    %v51 = vld [vmem:[%s1 + $0xb8] sm:$0xff]
    %v52 = vld [vmem:[%s1 + $0xc0] sm:$0xff]
    %v53 = vld [vmem:[%s1 + $0xc8] sm:$0xff]
    %v54 = vld [vmem:[%s1 + $0xd0] sm:$0xff]
    %v55 = vld [vmem:[%s1 + $0xd8] sm:$0xff]
    %v56 = vld [vmem:[%s1 + $0xe0] sm:$0xff]
    %v57 = vld [vmem:[%s1 + $0xe8] sm:$0xff]
    %v58 = vld [vmem:[%s1 + $0xf0] sm:$0xff]
    %v59 = vld [vmem:[%s1 + $0xf8] sm:$0xff]
    %v60 = vld [vmem:[%s1 + $0x100] sm:$0xff]
    %v61 = vld [vmem:[%s1 + $0x108] sm:$0xff]
    %v62 = vld [vmem:[%s1 + $0x110] sm:$0xff]
    %v63 = vld [vmem:[%s1 + $0x118] sm:$0xff]
    %v64 = vld [vmem:[%s1 + $0x120] sm:$0xff]
    %v65 = vld [vmem:[%s1 + $0x128] sm:$0xff]
    %v66 = vld [vmem:[%s1 + $0x130] sm:$0xff]
    %v67 = vld [vmem:[%s1 + $0x138] sm:$0xff]
    %v68 = vld [vmem:[%s1 + $0x140] sm:$0xff]
    %v69 = vld [vmem:[%s1 + $0x148] sm:$0xff]
    %v70 = vld [vmem:[%s1 + $0x150] sm:$0xff]
    %v71 = vld [vmem:[%s1 + $0x158] sm:$0xff]
    %v72 = vld [vmem:[%s1 + $0x160] sm:$0xff]
    %v73 = vld [vmem:[%s1 + $0x168] sm:$0xff]
    %v74 = vld [vmem:[%s1 + $0x170] sm:$0xff]
    %v75 = vld [vmem:[%s1 + $0x178] sm:$0xff]
    %v76 = vld [vmem:[%s1 + $0x180] sm:$0xff]
    %v77 = vld [vmem:[%s1 + $0x188] sm:$0xff]
    %v78 = vld [vmem:[%s2] sm:$0x1]
    %v80 = vlaneseq
    %v81 = vshrl.u32 %v80, 7
    %v82 = vsub.s32 0, %v81
    %v83 = vrot.slane %v78, %v82
    %v86 = vcombine.high %v27, %v27
    %v88 = vunpack.c.l.s4 1983009808
    %v89 = vunpack.c.0.s8 %v88
    %v90 = vlaneseq
    %v91 = vshrl.u32 %v90, 7
    %v92 = vsub.s32 %v89, %v91
    %v93 = vrot.slane %v27, %v92
    %v95 = vunpack.c.l.s4 1983009808
    %v96 = vunpack.c.0.s8 %v95
    %v97 = vlaneseq
    %v98 = vshrl.u32 %v97, 7
    %v99 = vsub.s32 %v96, %v98
    %v100 = vrot.slane %v86, %v99
    %v101 = vcombine.high %v93, %v93
    %v102 = vcombine.high %v100, %v100
    %vm106 = vcmask 130048
    %v107 = vsel %vm106, %v102, 0
    %109 = vmatprep.subr.mxu0 0.0
    %110 = vmatpush1.msra.mxu0 %v28
    %111 = vmatprep.subr.mxu0 0.0
    %112 = vmatpush1.msra.mxu0 %v29
    %113 = vmatprep.subr.mxu0 0.0
    %114 = vmatpush1.msra.mxu0 %v30
    %115 = vmatprep.subr.mxu0 0.0
    %116 = vmatpush1.msra.mxu0 %v31
    %117 = vmatprep.subr.mxu0 0.0
    %118 = vmatpush1.msra.mxu0 %v32
    %119 = vmatprep.subr.mxu0 0.0
    %120 = vmatpush1.msra.mxu0 %v33
    %121 = vmatprep.subr.mxu0 0.0
    %122 = vmatpush1.msra.mxu0 %v34
    %123 = vmatprep.subr.mxu0 0.0
    %124 = vmatpush1.msra.mxu0 %v35
    %125 = vmatprep.subr.mxu0 0.0
    %126 = vmatpush1.msra.mxu0 %v36
    %127 = vmatprep.subr.mxu0 0.0
    %128 = vmatpush1.msra.mxu0 %v37
    %129 = vmatprep.subr.mxu0 0.0
    %130 = vmatpush1.msra.mxu0 %v38
    %131 = vmatprep.subr.mxu0 0.0
    %132 = vmatpush1.msra.mxu0 %v39
    %133 = vmatprep.subr.mxu0 0.0
    %134 = vmatpush1.msra.mxu0 %v40
    %135 = vmatprep.subr.mxu0 0.0
    %136 = vmatpush1.msra.mxu0 %v41
    %137 = vmatprep.subr.mxu0 0.0
    %138 = vmatpush1.msra.mxu0 %v42
    %139 = vmatprep.subr.mxu0 0.0
    %140 = vmatpush1.msra.mxu0 %v43
    %141 = vmatprep.subr.mxu0 0.0
    %142 = vmatpush1.msra.mxu0 %v44
    %143 = vmatprep.subr.mxu0 0.0
    %144 = vmatpush1.msra.mxu0 %v45
    %145 = vmatprep.subr.mxu0 0.0
    %146 = vmatpush1.msra.mxu0 %v46
    %147 = vmatprep.subr.mxu0 0.0
    %148 = vmatpush1.msra.mxu0 %v47
    %149 = vmatprep.subr.mxu0 0.0
    %150 = vmatpush1.msra.mxu0 %v48
    %151 = vmatprep.subr.mxu0 0.0
    %152 = vmatpush1.msra.mxu0 %v49
    %153 = vmatprep.subr.mxu0 0.0
    %154 = vmatpush1.msra.mxu0 %v50
    %155 = vmatprep.subr.mxu0 0.0
    %156 = vmatpush1.msra.mxu0 %v51
    %157 = vmatprep.subr.mxu0 0.0
    %158 = vmatpush1.msra.mxu0 %v52
    %159 = vmatprep.subr.mxu0 0.0
    %160 = vmatpush1.msra.mxu0 %v53
    %161 = vmatprep.subr.mxu0 0.0
    %162 = vmatpush1.msra.mxu0 %v54
    %163 = vmatprep.subr.mxu0 0.0
    %164 = vmatpush1.msra.mxu0 %v55
    %165 = vmatprep.subr.mxu0 0.0
    %166 = vmatpush1.msra.mxu0 %v56
    %167 = vmatprep.subr.mxu0 0.0
    %168 = vmatpush1.msra.mxu0 %v57
    %169 = vmatprep.subr.mxu0 0.0
    %170 = vmatpush1.msra.mxu0 %v58
    %171 = vmatprep.subr.mxu0 0.0
    %172 = vmatpush1.msra.mxu0 %v59
    %173 = vmatprep.mubr.f32.mxu0 %v101
    %174 = vmatmul.mubr.f32.gmra.mrb[0].mxu0 %v93
    %v175 = vpop.f32.mrb[0].mxu0
    %v176 = vadd.f32 %v83, %v175
    %v177 = vpop.f32.mrb[0].mxu0
    %178 = vdwg.mxu0
    %179 = vmatprep.subr.mxu0 0.0
    %180 = vmatpush1.msra.mxu0 %v60
    %181 = vmatprep.subr.mxu0 0.0
    %182 = vmatpush1.msra.mxu0 %v61
    %183 = vmatprep.subr.mxu0 0.0
    %184 = vmatpush1.msra.mxu0 %v62
    %185 = vmatprep.subr.mxu0 0.0
    %186 = vmatpush1.msra.mxu0 %v63
    %187 = vmatprep.subr.mxu0 0.0
    %188 = vmatpush1.msra.mxu0 %v64
    %189 = vmatprep.subr.mxu0 0.0
    %190 = vmatpush1.msra.mxu0 %v65
    %191 = vmatprep.subr.mxu0 0.0
    %192 = vmatpush1.msra.mxu0 %v66
    %193 = vmatprep.subr.mxu0 0.0
    %194 = vmatpush1.msra.mxu0 %v67
    %195 = vmatprep.subr.mxu0 0.0
    %196 = vmatpush1.msra.mxu0 %v68
    %197 = vmatprep.subr.mxu0 0.0
    %198 = vmatpush1.msra.mxu0 %v69
    %199 = vmatprep.subr.mxu0 0.0
    %200 = vmatpush1.msra.mxu0 %v70
    %201 = vmatprep.subr.mxu0 0.0
    %202 = vmatpush1.msra.mxu0 %v71
    %203 = vmatprep.subr.mxu0 0.0
    %204 = vmatpush1.msra.mxu0 %v72
    %205 = vmatprep.subr.mxu0 0.0
    %206 = vmatpush1.msra.mxu0 %v73
    %207 = vmatprep.subr.mxu0 0.0
    %208 = vmatpush1.msra.mxu0 %v74
    %209 = vmatprep.subr.mxu0 0.0
    %210 = vmatpush1.msra.mxu0 %v75
    %211 = vmatprep.subr.mxu0 0.0
    %212 = vmatpush1.msra.mxu0 %v76
    %213 = vmatprep.subr.mxu0 0.0
    %214 = vmatpush1.msra.mxu0 %v77
    %215 = vmatprep.subr.mxu0 0.0
    %216 = vmatpush1.msra.mxu0 0.0
    %217 = vmatprep.subr.mxu0 0.0
    %218 = vmatpush1.msra.mxu0 0.0
    %219 = vmatprep.subr.mxu0 0.0
    %220 = vmatpush1.msra.mxu0 0.0
    %221 = vmatprep.subr.mxu0 0.0
    %222 = vmatpush1.msra.mxu0 0.0
    %223 = vmatprep.subr.mxu0 0.0
    %224 = vmatpush1.msra.mxu0 0.0
    %225 = vmatprep.subr.mxu0 0.0
    %226 = vmatpush1.msra.mxu0 0.0
    %227 = vmatprep.subr.mxu0 0.0
    %228 = vmatpush1.msra.mxu0 0.0
    %229 = vmatprep.subr.mxu0 0.0
    %230 = vmatpush1.msra.mxu0 0.0
    %231 = vmatprep.subr.mxu0 0.0
    %232 = vmatpush1.msra.mxu0 0.0
    %233 = vmatprep.subr.mxu0 0.0
    %234 = vmatpush1.msra.mxu0 0.0
    %235 = vmatprep.subr.mxu0 0.0
    %236 = vmatpush1.msra.mxu0 0.0
    %237 = vmatprep.subr.mxu0 0.0
    %238 = vmatpush1.msra.mxu0 0.0
    %239 = vmatprep.subr.mxu0 0.0
    %240 = vmatpush1.msra.mxu0 0.0
    %241 = vmatprep.subr.mxu0 0.0
    %242 = vmatpush1.msra.mxu0 0.0
    %243 = vmatprep.mubr.f32.mxu0 %v107
    %244 = vmatmul.mubr.f32.gmra.mrb[0].mxu0 %v100
    %v245 = vpop.f32.mrb[0].mxu0
    %v246 = vadd.f32 %v176, %v245
    %v247 = vpop.f32.mrb[0].mxu0
    %248 = vdwg.mxu0
    %v249 = vmax.f32 %v246, 0.0
    %v250 = vld [vmem:[%s3] sm:$0xff]
    %v251 = vld [vmem:[%s3 + $0x8] sm:$0xff]
    %v252 = vld [vmem:[%s3 + $0x10] sm:$0xff]
    %v253 = vld [vmem:[%s3 + $0x18] sm:$0xff]
    %v254 = vld [vmem:[%s3 + $0x20] sm:$0xff]
    %v255 = vld [vmem:[%s3 + $0x28] sm:$0xff]
    %v256 = vld [vmem:[%s3 + $0x30] sm:$0xff]
    %v257 = vld [vmem:[%s3 + $0x38] sm:$0xff]
    %v258 = vld [vmem:[%s3 + $0x40] sm:$0xff]
    %v259 = vld [vmem:[%s3 + $0x48] sm:$0xff]
    %v260 = vld [vmem:[%s3 + $0x50] sm:$0xff]
    %v261 = vld [vmem:[%s3 + $0x58] sm:$0xff]
    %v262 = vld [vmem:[%s3 + $0x60] sm:$0xff]
    %v263 = vld [vmem:[%s3 + $0x68] sm:$0xff]
    %v264 = vld [vmem:[%s3 + $0x70] sm:$0xff]
    %v265 = vld [vmem:[%s4] sm:$0x1]
    %v267 = vlaneseq
    %v268 = vshrl.u32 %v267, 7
    %v269 = vsub.s32 0, %v268
    %v270 = vrot.slane %v265, %v269
    %vm272 = vcmask 982016
    %v274 = vsel %vm272, %v249, 0
    %276 = vmatprep.subr.mxu0 0.0
    %277 = vmatpush1.msra.mxu0 %v250
    %278 = vmatprep.subr.mxu0 0.0
    %279 = vmatpush1.msra.mxu0 %v251
    %280 = vmatprep.subr.mxu0 0.0
    %281 = vmatpush1.msra.mxu0 %v252
    %282 = vmatprep.subr.mxu0 0.0
    %283 = vmatpush1.msra.mxu0 %v253
    %284 = vmatprep.subr.mxu0 0.0
    %285 = vmatpush1.msra.mxu0 %v254
    %286 = vmatprep.subr.mxu0 0.0
    %287 = vmatpush1.msra.mxu0 %v255
    %288 = vmatprep.subr.mxu0 0.0
    %289 = vmatpush1.msra.mxu0 %v256
    %290 = vmatprep.subr.mxu0 0.0
    %291 = vmatpush1.msra.mxu0 %v257
    %292 = vmatprep.subr.mxu0 0.0
    %293 = vmatpush1.msra.mxu0 %v258
    %294 = vmatprep.subr.mxu0 0.0
    %295 = vmatpush1.msra.mxu0 %v259
    %296 = vmatprep.subr.mxu0 0.0
    %297 = vmatpush1.msra.mxu0 %v260
    %298 = vmatprep.subr.mxu0 0.0
    %299 = vmatpush1.msra.mxu0 %v261
    %300 = vmatprep.subr.mxu0 0.0
    %301 = vmatpush1.msra.mxu0 %v262
    %302 = vmatprep.subr.mxu0 0.0
    %303 = vmatpush1.msra.mxu0 %v263
    %304 = vmatprep.subr.mxu0 0.0
    %305 = vmatpush1.msra.mxu0 %v264
    %306 = vmatprep.subr.mxu0 0.0
    %307 = vmatpush1.msra.mxu0 0.0
    %308 = vmatprep.subr.mxu0 0.0
    %309 = vmatpush1.msra.mxu0 0.0
    %310 = vmatprep.subr.mxu0 0.0
    %311 = vmatpush1.msra.mxu0 0.0
    %312 = vmatprep.subr.mxu0 0.0
    %313 = vmatpush1.msra.mxu0 0.0
    %314 = vmatprep.subr.mxu0 0.0
    %315 = vmatpush1.msra.mxu0 0.0
    %316 = vmatprep.subr.mxu0 0.0
    %317 = vmatpush1.msra.mxu0 0.0
    %318 = vmatprep.subr.mxu0 0.0
    %319 = vmatpush1.msra.mxu0 0.0
    %320 = vmatprep.subr.mxu0 0.0
    %321 = vmatpush1.msra.mxu0 0.0
    %322 = vmatprep.subr.mxu0 0.0
    %323 = vmatpush1.msra.mxu0 0.0
    %324 = vmatprep.subr.mxu0 0.0
    %325 = vmatpush1.msra.mxu0 0.0
    %326 = vmatprep.subr.mxu0 0.0
    %327 = vmatpush1.msra.mxu0 0.0
    %328 = vmatprep.subr.mxu0 0.0
    %329 = vmatpush1.msra.mxu0 0.0
    %330 = vmatprep.subr.mxu0 0.0
    %331 = vmatpush1.msra.mxu0 0.0
    %332 = vmatprep.subr.mxu0 0.0
    %333 = vmatpush1.msra.mxu0 0.0
    %334 = vmatprep.subr.mxu0 0.0
    %335 = vmatpush1.msra.mxu0 0.0
    %336 = vmatprep.subr.mxu0 0.0
    %337 = vmatpush1.msra.mxu0 0.0
    %338 = vmatprep.subr.mxu0 0.0
    %339 = vmatpush1.msra.mxu0 0.0
    %340 = vmatprep.mubr.f32.mxu0 0.0
    %341 = vmatmul.mubr.f32.gmra.mrb[0].mxu0 %v274
    %v342 = vpop.f32.mrb[0].mxu0
    %v343 = vadd.f32 %v270, %v342
    %v344 = vpop.f32.mrb[0].mxu0
    %345 = vdwg.mxu0
    %v346 = vmax.f32 %v343, 0.0
    %v347 = vld [vmem:[%s5] sm:$0xff]
    %v348 = vld [vmem:[%s5 + $0x8] sm:$0xff]
    %v349 = vld [vmem:[%s5 + $0x10] sm:$0xff]
    %v350 = vld [vmem:[%s5 + $0x18] sm:$0xff]
    %v351 = vld [vmem:[%s5 + $0x20] sm:$0xff]
    %v352 = vld [vmem:[%s5 + $0x28] sm:$0xff]
    %v353 = vld [vmem:[%s5 + $0x30] sm:$0xff]
    %v354 = vld [vmem:[%s5 + $0x38] sm:$0xff]
    %v355 = vld [vmem:[%s5 + $0x40] sm:$0xff]
    %v356 = vld [vmem:[%s5 + $0x48] sm:$0xff]
    %v357 = vld [vmem:[%s5 + $0x50] sm:$0xf]
    %v358 = vld [vmem:[%s6] sm:$0x1]
    %v360 = vlaneseq
    %v361 = vshrl.u32 %v360, 7
    %v362 = vsub.s32 0, %v361
    %v363 = vrot.slane %v358, %v362
    %vm365 = vcmask 687104
    %v367 = vsel %vm365, %v346, 0
    %vm369 = vcmask 1043456
    %v371 = vsel %vm369, %v357, 0
    %373 = vmatprep.subr.mxu0 0.0
    %374 = vmatpush1.msra.mxu0 %v347
    %375 = vmatprep.subr.mxu0 0.0
    %376 = vmatpush1.msra.mxu0 %v348
    %377 = vmatprep.subr.mxu0 0.0
    %378 = vmatpush1.msra.mxu0 %v349
    %379 = vmatprep.subr.mxu0 0.0
    %380 = vmatpush1.msra.mxu0 %v350
    %381 = vmatprep.subr.mxu0 0.0
    %382 = vmatpush1.msra.mxu0 %v351
    %383 = vmatprep.subr.mxu0 0.0
    %384 = vmatpush1.msra.mxu0 %v352
    %385 = vmatprep.subr.mxu0 0.0
    %386 = vmatpush1.msra.mxu0 %v353
    %387 = vmatprep.subr.mxu0 0.0
    %388 = vmatpush1.msra.mxu0 %v354
    %389 = vmatprep.subr.mxu0 0.0
    %390 = vmatpush1.msra.mxu0 %v355
    %391 = vmatprep.subr.mxu0 0.0
    %392 = vmatpush1.msra.mxu0 %v356
    %393 = vmatprep.subr.mxu0 0.0
    %394 = vmatpush1.msra.mxu0 %v371
    %395 = vmatprep.subr.mxu0 0.0
    %396 = vmatpush1.msra.mxu0 0.0
    %397 = vmatprep.subr.mxu0 0.0
    %398 = vmatpush1.msra.mxu0 0.0
    %399 = vmatprep.subr.mxu0 0.0
    %400 = vmatpush1.msra.mxu0 0.0
    %401 = vmatprep.subr.mxu0 0.0
    %402 = vmatpush1.msra.mxu0 0.0
    %403 = vmatprep.subr.mxu0 0.0
    %404 = vmatpush1.msra.mxu0 0.0
    %405 = vmatprep.subr.mxu0 0.0
    %406 = vmatpush1.msra.mxu0 0.0
    %407 = vmatprep.subr.mxu0 0.0
    %408 = vmatpush1.msra.mxu0 0.0
    %409 = vmatprep.subr.mxu0 0.0
    %410 = vmatpush1.msra.mxu0 0.0
    %411 = vmatprep.subr.mxu0 0.0
    %412 = vmatpush1.msra.mxu0 0.0
    %413 = vmatprep.subr.mxu0 0.0
    %414 = vmatpush1.msra.mxu0 0.0
    %415 = vmatprep.subr.mxu0 0.0
    %416 = vmatpush1.msra.mxu0 0.0
    %417 = vmatprep.subr.mxu0 0.0
    %418 = vmatpush1.msra.mxu0 0.0
    %419 = vmatprep.subr.mxu0 0.0
    %420 = vmatpush1.msra.mxu0 0.0
    %421 = vmatprep.subr.mxu0 0.0
    %422 = vmatpush1.msra.mxu0 0.0
    %423 = vmatprep.subr.mxu0 0.0
    %424 = vmatpush1.msra.mxu0 0.0
    %425 = vmatprep.subr.mxu0 0.0
    %426 = vmatpush1.msra.mxu0 0.0
    %427 = vmatprep.subr.mxu0 0.0
    %428 = vmatpush1.msra.mxu0 0.0
    %429 = vmatprep.subr.mxu0 0.0
    %430 = vmatpush1.msra.mxu0 0.0
    %431 = vmatprep.subr.mxu0 0.0
    %432 = vmatpush1.msra.mxu0 0.0
    %433 = vmatprep.subr.mxu0 0.0
    %434 = vmatpush1.msra.mxu0 0.0
    %435 = vmatprep.subr.mxu0 0.0
    %436 = vmatpush1.msra.mxu0 0.0
    %437 = vmatprep.mubr.f32.mxu0 0.0
    %438 = vmatmul.mubr.f32.gmra.mrb[0].mxu0 %v367
    %v439 = vpop.f32.mrb[0].mxu0
    %v440 = vadd.f32 %v363, %v439
    %v441 = vpop.f32.mrb[0].mxu0
    %442 = vdwg.mxu0
    %vm443 = vcmask 74752
    %444 = vst.msk [vmem:[#allocation2] sm:$0x3] %vm443, %v440
    // Predicated region
    $region30: #{_net_forward.5} parent=1 // pred_check
      _
    $region31: #{_net_forward.5} parent=1 // pred_check_branch
      %446 = sbr.rel (0) target = $region33
    $region32: #{_net_forward.5} parent=1 // pred_region
      %s448 = ssub.s32 32, 32
      %449 = vsyncadd [#allocation3], %s448
      %s451 = sshll.u32 [#allocation2], 4
      %s452 = int_to_ptr.vmem [resolvable:$true] %s451
      %454 = dma.vmem_to_hbm [thread:$0]  %s452, 32, %s7, [#allocation3]
    $region33: #{_net_forward.5} parent=1 // pred_fallthru
      _
    // Predicated region
    $region34: #{_net_forward.5} parent=1 // pred_check
      _
    $region35: #{_net_forward.5} parent=1 // pred_check_branch
      %456 = sbr.rel (0) target = $region37
    $region36: #{_net_forward.5} parent=1 // pred_region
      %457 = dma.done [#allocation3], 32
    $region37: #{_net_forward.5} parent=1 // pred_fallthru
      _
    %458 = vsyncpa [#allocation3], 1

</llo_original>
